<compile_context>
chip_gen: v7x
topology: tpu7x:2x2x1
jax: 0.10.0
libtpu: 0.0.40
codegen_flags: <defaults>
</compile_context>

<pallas_src>
import functools

import jax
import jax.numpy as jnp
from jax.experimental import pallas as pl
from jax.experimental.pallas import tpu as pltpu

# ---------------- model config (small, synthetic CLIPTextModel) -------------
VOCAB = 128       # stand-in for 49408
MAX_LEN = 8       # stand-in for max_length=77 (pad to 128 at real scale)
D_MODEL = 32      # stand-in for 768
N_HEADS = 4       # stand-in for 12
D_HEAD = D_MODEL // N_HEADS
D_FF = 128        # stand-in for 3072 (4x hidden)
N_LAYERS = 2      # stand-in for 12
EPS = 1e-5        # CLIP layer-norm eps

MASK_VALUE = -1e30  # finite mask constant (robust; exp() of masked-minus-max -> 0)


# ------------------------------ Pallas kernel --------------------------------
def _ln(x, g, b):
    """LayerNorm over last axis (f32 in-register)."""
    mu = jnp.mean(x, axis=-1, keepdims=True)
    var = jnp.mean(jnp.square(x - mu), axis=-1, keepdims=True)
    return (x - mu) * jax.lax.rsqrt(var + EPS) * g + b


def _clip_stack_kernel(x_ref, ln1_g_ref, ln1_b_ref, qkv_w_ref, qkv_b_ref,
                       o_w_ref, o_b_ref, ln2_g_ref, ln2_b_ref,
                       fc1_w_ref, fc1_b_ref, fc2_w_ref, fc2_b_ref,
                       lnf_g_ref, lnf_b_ref, out_ref, x_acc,
                       *, n_heads, d_head):
    """One grid step = one encoder layer for one batch element.

    The activation stays resident in the f32 VMEM scratch `x_acc` across the
    (innermost, "arbitrary") layer axis; HBM is touched only at layer 0 (load)
    and the last layer (store of LN_final(x)).
    """
    layer = pl.program_id(1)
    n_layers = pl.num_programs(1)

    @pl.when(layer == 0)
    def _():
        x_acc[...] = x_ref[0].astype(jnp.float32)

    x = x_acc[...]                                 # [L, D] f32, VMEM-resident
    L, D = x.shape

    # ---------- attention block (pre-LN) ----------
    h = _ln(x, ln1_g_ref[0], ln1_b_ref[0])

    # fused QKV projection: single bf16 MXU pass, f32 accumulation.
    # 1/sqrt(d_head) is already folded into the Q columns of qkv_w / qkv_b.
    qkv = jnp.dot(h.astype(jnp.bfloat16), qkv_w_ref[0],
                  preferred_element_type=jnp.float32) + qkv_b_ref[0]

    # causal mask (shared across heads) — matches HF CLIPTextModel, which uses
    # only the causal mask when no attention_mask is passed.
    row = jax.lax.broadcasted_iota(jnp.int32, (L, L), 0)
    col = jax.lax.broadcasted_iota(jnp.int32, (L, L), 1)
    causal = col <= row

    # Per-head attention; head outputs are gathered into one lane-dense [L, D]
    # buffer and the out-projection is a single K=D matmul afterwards.
    # TODO(synk): at CLIP-L, align head slabs to 128 lanes (pad d_head /
    # reorder qkv_w columns) so these per-head slices are free subviews.
    heads = []
    for hh in range(n_heads):                      # static unroll over heads
        lo = hh * d_head
        q_h = qkv[:, lo:lo + d_head].astype(jnp.bfloat16)          # [L, Dh]
        k_h = qkv[:, D + lo:D + lo + d_head].astype(jnp.bfloat16)  # [L, Dh]
        v_h = qkv[:, 2 * D + lo:2 * D + lo + d_head].astype(jnp.bfloat16)

        # QK^T without materializing a transpose (contract last dims).
        s = jax.lax.dot_general(q_h, k_h, (((1,), (1,)), ((), ())),
                                preferred_element_type=jnp.float32)
        s = jnp.where(causal, s, MASK_VALUE)
        s = s - jnp.max(s, axis=-1, keepdims=True)
        p = jnp.exp(s)
        p = p * pl.reciprocal(jnp.sum(p, axis=-1, keepdims=True), approx=True)

        heads.append(jnp.dot(p.astype(jnp.bfloat16), v_h,
                             preferred_element_type=jnp.float32))  # [L, Dh]

    attn = jnp.concatenate(heads, axis=-1)         # lane-dense [L, D]
    attn = jnp.dot(attn.astype(jnp.bfloat16), o_w_ref[0],
                   preferred_element_type=jnp.float32) + o_b_ref[0]
    x = x + attn                                   # residual

    # ---------- MLP block (pre-LN, quick_gelu) ----------
    h = _ln(x, ln2_g_ref[0], ln2_b_ref[0])
    h = jnp.dot(h.astype(jnp.bfloat16), fc1_w_ref[0],
                preferred_element_type=jnp.float32) + fc1_b_ref[0]
    h = h * jax.nn.sigmoid(1.702 * h)              # quick_gelu
    h = jnp.dot(h.astype(jnp.bfloat16), fc2_w_ref[0],
                preferred_element_type=jnp.float32) + fc2_b_ref[0]
    x = x + h                                      # residual

    x_acc[...] = x                                 # stays resident in VMEM

    # fused final LayerNorm -> last_hidden_state, written only once.
    @pl.when(layer == n_layers - 1)
    def _():
        out_ref[0] = _ln(x, lnf_g_ref[...], lnf_b_ref[...]).astype(out_ref.dtype)


def clip_text_transformer(x, stack, lnf_g, lnf_b):
    """Run all encoder layers + final LN in a single pallas_call. x: [B, L, D]."""
    B, L, D = x.shape

    def lw(arr):
        # layer-indexed weight block: [N_LAYERS, A, C] -> block (1, A, C)
        return pl.BlockSpec((1,) + arr.shape[1:], lambda b, l: (l, 0, 0))

    kern = functools.partial(_clip_stack_kernel, n_heads=N_HEADS, d_head=D_HEAD)
    return pl.pallas_call(
        kern,
        out_shape=jax.ShapeDtypeStruct((B, L, D), jnp.float32),
        grid=(B, N_LAYERS),            # layer axis innermost -> weight pipeline
        in_specs=[
            pl.BlockSpec((1, L, D), lambda b, l: (b, 0, 0)),   # x (resident across layers)
            lw(stack["ln1_g"]), lw(stack["ln1_b"]),
            lw(stack["qkv_w"]), lw(stack["qkv_b"]),
            lw(stack["o_w"]), lw(stack["o_b"]),
            lw(stack["ln2_g"]), lw(stack["ln2_b"]),
            lw(stack["fc1_w"]), lw(stack["fc1_b"]),
            lw(stack["fc2_w"]), lw(stack["fc2_b"]),
            pl.BlockSpec((1, D), lambda b, l: (0, 0)),          # lnf gamma
            pl.BlockSpec((1, D), lambda b, l: (0, 0)),          # lnf beta
        ],
        out_specs=pl.BlockSpec((1, L, D), lambda b, l: (b, 0, 0)),
        scratch_shapes=[pltpu.VMEM((L, D), jnp.float32)],       # resident activation
        compiler_params=pltpu.CompilerParams(
            dimension_semantics=("parallel", "arbitrary"),
            # explicit VMEM budget; re-derive at CLIP-L (v7x: 64 MiB/TC physical,
            # use bf16 weights + tiled fc1/fc2 + Buffered(1) constant specs).
            vmem_limit_bytes=32 * 1024 * 1024),
    )(x,
      stack["ln1_g"], stack["ln1_b"],
      stack["qkv_w"], stack["qkv_b"],
      stack["o_w"], stack["o_b"],
      stack["ln2_g"], stack["ln2_b"],
      stack["fc1_w"], stack["fc1_b"],
      stack["fc2_w"], stack["fc2_b"],
      lnf_g, lnf_b)


# --------------------------- parameter initialization ------------------------
def init_params(key):
    """Synthetic frozen CLIPTextModel params, stacked per-layer and prepped for
    the kernel: bf16 MXU weights, attention scale folded into Q columns."""
    keys = iter(jax.random.split(key, 2 + N_LAYERS * 6))

    def normal(k, shape, std=0.02):
        return std * jax.random.normal(k, shape, dtype=jnp.float32)

    tok_emb = normal(next(keys), (VOCAB, D_MODEL))
    pos_emb = normal(next(keys), (MAX_LEN, D_MODEL))

    scale = 1.0 / (D_HEAD ** 0.5)
    per = {k: [] for k in ("ln1_g", "ln1_b", "qkv_w", "qkv_b", "o_w", "o_b",
                           "ln2_g", "ln2_b", "fc1_w", "fc1_b", "fc2_w", "fc2_b")}
    for _ in range(N_LAYERS):
        q_w = normal(next(keys), (D_MODEL, D_MODEL))
        k_w = normal(next(keys), (D_MODEL, D_MODEL))
        v_w = normal(next(keys), (D_MODEL, D_MODEL))
        q_b = jnp.zeros((D_MODEL,), jnp.float32)
        k_b = jnp.zeros((D_MODEL,), jnp.float32)
        v_b = jnp.zeros((D_MODEL,), jnp.float32)
        # fold 1/sqrt(d_head) into the frozen Q weight AND bias columns
        per["qkv_w"].append(jnp.concatenate([q_w * scale, k_w, v_w], axis=1))
        per["qkv_b"].append(jnp.concatenate([q_b * scale, k_b, v_b]))
        per["o_w"].append(normal(next(keys), (D_MODEL, D_MODEL)))
        per["o_b"].append(jnp.zeros((D_MODEL,), jnp.float32))
        per["ln1_g"].append(jnp.ones((D_MODEL,), jnp.float32))
        per["ln1_b"].append(jnp.zeros((D_MODEL,), jnp.float32))
        per["ln2_g"].append(jnp.ones((D_MODEL,), jnp.float32))
        per["ln2_b"].append(jnp.zeros((D_MODEL,), jnp.float32))
        per["fc1_w"].append(normal(next(keys), (D_MODEL, D_FF)))
        per["fc1_b"].append(jnp.zeros((D_FF,), jnp.float32))
        per["fc2_w"].append(normal(next(keys), (D_FF, D_MODEL)))
        per["fc2_b"].append(jnp.zeros((D_MODEL,), jnp.float32))

    def stack_w(name):   # matmul weights -> bf16, [N_LAYERS, K, N]
        return jnp.stack(per[name]).astype(jnp.bfloat16)

    def stack_v(name):   # LN params / biases stay f32, [N_LAYERS, 1, N]
        return jnp.stack(per[name])[:, None, :]

    stack = {
        "ln1_g": stack_v("ln1_g"), "ln1_b": stack_v("ln1_b"),
        "qkv_w": stack_w("qkv_w"), "qkv_b": stack_v("qkv_b"),
        "o_w": stack_w("o_w"), "o_b": stack_v("o_b"),
        "ln2_g": stack_v("ln2_g"), "ln2_b": stack_v("ln2_b"),
        "fc1_w": stack_w("fc1_w"), "fc1_b": stack_v("fc1_b"),
        "fc2_w": stack_w("fc2_w"), "fc2_b": stack_v("fc2_b"),
    }
    return {
        "tok_emb": tok_emb, "pos_emb": pos_emb,
        "lnf_g": jnp.ones((1, D_MODEL), jnp.float32),
        "lnf_b": jnp.zeros((1, D_MODEL), jnp.float32),
        "stack": stack,
    }


# ------------------------------- forward pass --------------------------------
@jax.jit
def frozen_clip_embed(params, input_ids):
    """CLIPTextModel forward; returns last_hidden_state [B, L, D]."""
    B, L = input_ids.shape
    # token-embedding gather + learned positional embedding (JAX glue — a
    # per-token gather has no clean Pallas tile expression at this size)
    x = params["tok_emb"][input_ids] + params["pos_emb"][None, :L, :]
    return clip_text_transformer(x, params["stack"],
                                 params["lnf_g"], params["lnf_b"])


# --------------------------- pure-JAX reference ------------------------------
def reference_forward(params, input_ids):
    """f32 reference with identical (bf16-rounded, scale-folded) weights."""
    st = params["stack"]
    B, L = input_ids.shape
    x = params["tok_emb"][input_ids] + params["pos_emb"][None, :L, :]
    causal = jnp.tril(jnp.ones((L, L), dtype=bool))
    for i in range(N_LAYERS):
        h = _ln(x, st["ln1_g"][i, 0], st["ln1_b"][i, 0])
        qkv = h @ st["qkv_w"][i].astype(jnp.float32) + st["qkv_b"][i, 0]
        q, k, v = jnp.split(qkv, 3, axis=-1)
        q = q.reshape(B, L, N_HEADS, D_HEAD)
        k = k.reshape(B, L, N_HEADS, D_HEAD)
        v = v.reshape(B, L, N_HEADS, D_HEAD)
        s = jnp.einsum("bqhd,bkhd->bhqk", q, k)
        s = jnp.where(causal[None, None], s, MASK_VALUE)
        p = jax.nn.softmax(s, axis=-1)
        o = jnp.einsum("bhqk,bkhd->bqhd", p, v).reshape(B, L, D_MODEL)
        x = x + o @ st["o_w"][i].astype(jnp.float32) + st["o_b"][i, 0]
        h = _ln(x, st["ln2_g"][i, 0], st["ln2_b"][i, 0])
        h = h @ st["fc1_w"][i].astype(jnp.float32) + st["fc1_b"][i, 0]
        h = h * jax.nn.sigmoid(1.702 * h)
        x = x + h @ st["fc2_w"][i].astype(jnp.float32) + st["fc2_b"][i, 0]
    return _ln(x, params["lnf_g"], params["lnf_b"])


# ------------------------------------ main ------------------------------------
if __name__ == "__main__":
    key = jax.random.PRNGKey(0)
    pkey, tkey = jax.random.split(key)

    params = init_params(pkey)

    B = 2
    # deterministic "tokenized" ids (padding='max_length' -> shape [B, MAX_LEN])
    input_ids = jax.random.randint(tkey, (B, MAX_LEN), 0, VOCAB, dtype=jnp.int32)

    z = frozen_clip_embed(params, input_ids)
    z = jax.block_until_ready(z)

    assert z.shape == (B, MAX_LEN, D_MODEL)
    assert z.dtype == jnp.float32
    assert bool(jnp.all(jnp.isfinite(z)))

    # loose tolerance: bf16 MXU operands + approx-reciprocal softmax denom
    z_ref = reference_forward(params, input_ids)
    max_err = float(jnp.max(jnp.abs(z - z_ref)))
    assert max_err < 0.1, f"mismatch vs reference: {max_err}"

    print("KERNEL_OK")
</pallas_src>

<mosaic_0001>
module attributes {stable_mosaic.version = 11 : i64} {
  func.func @_clip_stack_kernel(%arg0: i32, %arg1: i32, %arg2: memref<1x8x32xf32, #tpu.memory_space<vmem>>, %arg3: memref<1x1x32xf32, #tpu.memory_space<vmem>>, %arg4: memref<1x1x32xf32, #tpu.memory_space<vmem>>, %arg5: memref<1x32x96xbf16, #tpu.memory_space<vmem>>, %arg6: memref<1x1x96xf32, #tpu.memory_space<vmem>>, %arg7: memref<1x32x32xbf16, #tpu.memory_space<vmem>>, %arg8: memref<1x1x32xf32, #tpu.memory_space<vmem>>, %arg9: memref<1x1x32xf32, #tpu.memory_space<vmem>>, %arg10: memref<1x1x32xf32, #tpu.memory_space<vmem>>, %arg11: memref<1x32x128xbf16, #tpu.memory_space<vmem>>, %arg12: memref<1x1x128xf32, #tpu.memory_space<vmem>>, %arg13: memref<1x128x32xbf16, #tpu.memory_space<vmem>>, %arg14: memref<1x1x32xf32, #tpu.memory_space<vmem>>, %arg15: memref<1x32xf32, #tpu.memory_space<vmem>>, %arg16: memref<1x32xf32, #tpu.memory_space<vmem>>, %arg17: memref<1x8x32xf32, #tpu.memory_space<vmem>>, %arg18: memref<8x32xf32, #tpu.memory_space<vmem>>) attributes {dimension_semantics = [#tpu.dimension_semantics<parallel>, #tpu.dimension_semantics<arbitrary>], iteration_bounds = array<i64: 2, 2>, scalar_prefetch = 0 : i64, scratch_operands = 1 : i64, tpu.core_type = #tpu.core_type<tc>, window_params = [{transform_indices = @transform_0, window_bounds = array<i64: 1, 8, 32>}, {transform_indices = @transform_1, window_bounds = array<i64: 1, 1, 32>}, {transform_indices = @transform_2, window_bounds = array<i64: 1, 1, 32>}, {transform_indices = @transform_3, window_bounds = array<i64: 1, 32, 96>}, {transform_indices = @transform_4, window_bounds = array<i64: 1, 1, 96>}, {transform_indices = @transform_5, window_bounds = array<i64: 1, 32, 32>}, {transform_indices = @transform_6, window_bounds = array<i64: 1, 1, 32>}, {transform_indices = @transform_7, window_bounds = array<i64: 1, 1, 32>}, {transform_indices = @transform_8, window_bounds = array<i64: 1, 1, 32>}, {transform_indices = @transform_9, window_bounds = array<i64: 1, 32, 128>}, {transform_indices = @transform_10, window_bounds = array<i64: 1, 1, 128>}, {transform_indices = @transform_11, window_bounds = array<i64: 1, 128, 32>}, {transform_indices = @transform_12, window_bounds = array<i64: 1, 1, 32>}, {pipeline_mode = #tpu.pipeline_mode<synchronous>, transform_indices = @transform_13, window_bounds = array<i64: 1, 32>}, {pipeline_mode = #tpu.pipeline_mode<synchronous>, transform_indices = @transform_14, window_bounds = array<i64: 1, 32>}, {transform_indices = @transform_15, window_bounds = array<i64: 1, 8, 32>}]} {
    %c0_i32 = arith.constant 0 : i32
    %0 = arith.cmpi eq, %arg1, %c0_i32 : i32
    %1 = arith.extui %0 : i1 to i32
    %c0_i32_0 = arith.constant 0 : i32
    %2 = arith.cmpi ne, %1, %c0_i32_0 : i32
    scf.if %2 {
      %c0_76 = arith.constant 0 : index
      %c0_77 = arith.constant 0 : index
      %c0_78 = arith.constant 0 : index
      %190 = vector.load %arg2[%c0_76, %c0_77, %c0_78] : memref<1x8x32xf32, #tpu.memory_space<vmem>>, vector<1x8x32xf32>
      %191 = vector.shape_cast %190 : vector<1x8x32xf32> to vector<8x32xf32>
      %c0_79 = arith.constant 0 : index
      %c0_80 = arith.constant 0 : index
      %192 = vector.load %arg18[%c0_79, %c0_80] : memref<8x32xf32, #tpu.memory_space<vmem>>, vector<8x32xf32>
      tpu.vector_store %arg18[%c0_79, %c0_80], %191 {strides = array<i32>} : memref<8x32xf32, #tpu.memory_space<vmem>>, vector<8x32xf32>,
    } else {
    }
    %c0 = arith.constant 0 : index
    %c0_1 = arith.constant 0 : index
    %3 = vector.load %arg18[%c0, %c0_1] : memref<8x32xf32, #tpu.memory_space<vmem>>, vector<8x32xf32>
    %c0_2 = arith.constant 0 : index
    %c0_3 = arith.constant 0 : index
    %c0_4 = arith.constant 0 : index
    %4 = vector.load %arg3[%c0_2, %c0_3, %c0_4] : memref<1x1x32xf32, #tpu.memory_space<vmem>>, vector<1x1x32xf32>
    %5 = vector.shape_cast %4 : vector<1x1x32xf32> to vector<1x32xf32>
    %c0_5 = arith.constant 0 : index
    %c0_6 = arith.constant 0 : index
    %c0_7 = arith.constant 0 : index
    %6 = vector.load %arg4[%c0_5, %c0_6, %c0_7] : memref<1x1x32xf32, #tpu.memory_space<vmem>>, vector<1x1x32xf32>
    %7 = vector.shape_cast %6 : vector<1x1x32xf32> to vector<1x32xf32>
    %cst = arith.constant dense<0.000000e+00> : vector<8xf32>
    %8 = vector.multi_reduction <add>, %3, %cst [1] : vector<8x32xf32> to vector<8xf32>
    %9 = vector.shape_cast %8 : vector<8xf32> to vector<8x1xf32>
    %cst_8 = arith.constant 3.200000e+01 : f32
    %10 = vector.broadcast %cst_8 : f32 to vector<8x1xf32>
    %11 = arith.divf %9, %10 : vector<8x1xf32>
    %12 = vector.broadcast %11 : vector<8x1xf32> to vector<8x32xf32>
    %13 = arith.subf %3, %12 : vector<8x32xf32>
    %14 = arith.mulf %13, %13 : vector<8x32xf32>
    %cst_9 = arith.constant dense<0.000000e+00> : vector<8xf32>
    %15 = vector.multi_reduction <add>, %14, %cst_9 [1] : vector<8x32xf32> to vector<8xf32>
    %16 = vector.shape_cast %15 : vector<8xf32> to vector<8x1xf32>
    %cst_10 = arith.constant 3.200000e+01 : f32
    %17 = vector.broadcast %cst_10 : f32 to vector<8x1xf32>
    %18 = arith.divf %16, %17 : vector<8x1xf32>
    %19 = vector.broadcast %11 : vector<8x1xf32> to vector<8x32xf32>
    %20 = arith.subf %3, %19 : vector<8x32xf32>
    %cst_11 = arith.constant 9.99999974E-6 : f32
    %21 = vector.broadcast %cst_11 : f32 to vector<8x1xf32>
    %22 = arith.addf %18, %21 : vector<8x1xf32>
    %23 = math.rsqrt %22 : vector<8x1xf32>
    %24 = vector.broadcast %23 : vector<8x1xf32> to vector<8x32xf32>
    %25 = arith.mulf %20, %24 : vector<8x32xf32>
    %26 = vector.broadcast %5 : vector<1x32xf32> to vector<8x32xf32>
    %27 = arith.mulf %25, %26 : vector<8x32xf32>
    %28 = vector.broadcast %7 : vector<1x32xf32> to vector<8x32xf32>
    %29 = arith.addf %27, %28 : vector<8x32xf32>
    %30 = arith.truncf %29 : vector<8x32xf32> to vector<8x32xbf16>
    %c0_12 = arith.constant 0 : index
    %c0_13 = arith.constant 0 : index
    %c0_14 = arith.constant 0 : index
    %31 = vector.load %arg5[%c0_12, %c0_13, %c0_14] : memref<1x32x96xbf16, #tpu.memory_space<vmem>>, vector<1x32x96xbf16>
    %32 = vector.shape_cast %31 : vector<1x32x96xbf16> to vector<32x96xbf16>
    %cst_15 = arith.constant dense<0.000000e+00> : vector<8x96xf32>
    %33 = tpu.matmul %30, %32, %cst_15 {dimension_numbers = #tpu.dot_dimension_numbers<[1], [0], [0], [1], [0, 0, 1, 1], [], []>} : vector<8x32xbf16>, vector<32x96xbf16>, vector<8x96xf32> -> vector<8x96xf32>
    %c0_16 = arith.constant 0 : index
    %c0_17 = arith.constant 0 : index
    %c0_18 = arith.constant 0 : index
    %34 = vector.load %arg6[%c0_16, %c0_17, %c0_18] : memref<1x1x96xf32, #tpu.memory_space<vmem>>, vector<1x1x96xf32>
    %35 = vector.shape_cast %34 : vector<1x1x96xf32> to vector<1x96xf32>
    %36 = vector.broadcast %35 : vector<1x96xf32> to vector<8x96xf32>
    %37 = arith.addf %33, %36 : vector<8x96xf32>
    %38 = tpu.iota {dimensions = array<i32: 0>} : vector<8x8xi32>
    %39 = tpu.iota {dimensions = array<i32: 1>} : vector<8x8xi32>
    %40 = arith.cmpi sle, %39, %38 : vector<8x8xi32>
    %41 = vector.extract_strided_slice %37 {offsets = [0, 0], sizes = [8, 8], strides = [1, 1]} : vector<8x96xf32> to vector<8x8xf32>
    %42 = arith.truncf %41 : vector<8x8xf32> to vector<8x8xbf16>
    %43 = vector.extract_strided_slice %37 {offsets = [0, 32], sizes = [8, 8], strides = [1, 1]} : vector<8x96xf32> to vector<8x8xf32>
    %44 = arith.truncf %43 : vector<8x8xf32> to vector<8x8xbf16>
    %45 = vector.extract_strided_slice %37 {offsets = [0, 64], sizes = [8, 8], strides = [1, 1]} : vector<8x96xf32> to vector<8x8xf32>
    %46 = arith.truncf %45 : vector<8x8xf32> to vector<8x8xbf16>
    %cst_19 = arith.constant dense<0.000000e+00> : vector<8x8xf32>
    %47 = tpu.matmul %42, %44, %cst_19 {dimension_numbers = #tpu.dot_dimension_numbers<[1], [1], [0], [0], [0, 0, 1, 0], [], []>} : vector<8x8xbf16>, vector<8x8xbf16>, vector<8x8xf32> -> vector<8x8xf32>
    %cst_20 = arith.constant -1.000000e+30 : f32
    %48 = vector.broadcast %cst_20 : f32 to vector<8x8xf32>
    %49 = arith.select %40, %47, %48 : vector<8x8xi1>, vector<8x8xf32>
    %cst_21 = arith.constant dense<0xFF800000> : vector<8xf32>
    %50 = vector.multi_reduction <maximumf>, %49, %cst_21 [1] : vector<8x8xf32> to vector<8xf32>
    %51 = vector.shape_cast %50 : vector<8xf32> to vector<8x1xf32>
    %52 = vector.broadcast %51 : vector<8x1xf32> to vector<8x8xf32>
    %53 = arith.subf %49, %52 : vector<8x8xf32>
    %54 = math.exp %53 : vector<8x8xf32>
    %cst_22 = arith.constant dense<0.000000e+00> : vector<8xf32>
    %55 = vector.multi_reduction <add>, %54, %cst_22 [1] : vector<8x8xf32> to vector<8xf32>
    %56 = vector.shape_cast %55 : vector<8xf32> to vector<8x1xf32>
    %57 = tpu.reciprocal %56 {approx = true} : vector<8x1xf32> -> vector<8x1xf32>
    %58 = vector.broadcast %57 : vector<8x1xf32> to vector<8x8xf32>
    %59 = arith.mulf %54, %58 : vector<8x8xf32>
    %60 = arith.truncf %59 : vector<8x8xf32> to vector<8x8xbf16>
    %cst_23 = arith.constant dense<0.000000e+00> : vector<8x8xf32>
    %61 = tpu.matmul %60, %46, %cst_23 {dimension_numbers = #tpu.dot_dimension_numbers<[1], [0], [0], [1], [0, 0, 1, 1], [], []>} : vector<8x8xbf16>, vector<8x8xbf16>, vector<8x8xf32> -> vector<8x8xf32>
    %62 = vector.extract_strided_slice %37 {offsets = [0, 8], sizes = [8, 8], strides = [1, 1]} : vector<8x96xf32> to vector<8x8xf32>
    %63 = arith.truncf %62 : vector<8x8xf32> to vector<8x8xbf16>
    %64 = vector.extract_strided_slice %37 {offsets = [0, 40], sizes = [8, 8], strides = [1, 1]} : vector<8x96xf32> to vector<8x8xf32>
    %65 = arith.truncf %64 : vector<8x8xf32> to vector<8x8xbf16>
    %66 = vector.extract_strided_slice %37 {offsets = [0, 72], sizes = [8, 8], strides = [1, 1]} : vector<8x96xf32> to vector<8x8xf32>
    %67 = arith.truncf %66 : vector<8x8xf32> to vector<8x8xbf16>
    %cst_24 = arith.constant dense<0.000000e+00> : vector<8x8xf32>
    %68 = tpu.matmul %63, %65, %cst_24 {dimension_numbers = #tpu.dot_dimension_numbers<[1], [1], [0], [0], [0, 0, 1, 0], [], []>} : vector<8x8xbf16>, vector<8x8xbf16>, vector<8x8xf32> -> vector<8x8xf32>
    %cst_25 = arith.constant -1.000000e+30 : f32
    %69 = vector.broadcast %cst_25 : f32 to vector<8x8xf32>
    %70 = arith.select %40, %68, %69 : vector<8x8xi1>, vector<8x8xf32>
    %cst_26 = arith.constant dense<0xFF800000> : vector<8xf32>
    %71 = vector.multi_reduction <maximumf>, %70, %cst_26 [1] : vector<8x8xf32> to vector<8xf32>
    %72 = vector.shape_cast %71 : vector<8xf32> to vector<8x1xf32>
    %73 = vector.broadcast %72 : vector<8x1xf32> to vector<8x8xf32>
    %74 = arith.subf %70, %73 : vector<8x8xf32>
    %75 = math.exp %74 : vector<8x8xf32>
    %cst_27 = arith.constant dense<0.000000e+00> : vector<8xf32>
    %76 = vector.multi_reduction <add>, %75, %cst_27 [1] : vector<8x8xf32> to vector<8xf32>
    %77 = vector.shape_cast %76 : vector<8xf32> to vector<8x1xf32>
    %78 = tpu.reciprocal %77 {approx = true} : vector<8x1xf32> -> vector<8x1xf32>
    %79 = vector.broadcast %78 : vector<8x1xf32> to vector<8x8xf32>
    %80 = arith.mulf %75, %79 : vector<8x8xf32>
    %81 = arith.truncf %80 : vector<8x8xf32> to vector<8x8xbf16>
    %cst_28 = arith.constant dense<0.000000e+00> : vector<8x8xf32>
    %82 = tpu.matmul %81, %67, %cst_28 {dimension_numbers = #tpu.dot_dimension_numbers<[1], [0], [0], [1], [0, 0, 1, 1], [], []>} : vector<8x8xbf16>, vector<8x8xbf16>, vector<8x8xf32> -> vector<8x8xf32>
    %83 = vector.extract_strided_slice %37 {offsets = [0, 16], sizes = [8, 8], strides = [1, 1]} : vector<8x96xf32> to vector<8x8xf32>
    %84 = arith.truncf %83 : vector<8x8xf32> to vector<8x8xbf16>
    %85 = vector.extract_strided_slice %37 {offsets = [0, 48], sizes = [8, 8], strides = [1, 1]} : vector<8x96xf32> to vector<8x8xf32>
    %86 = arith.truncf %85 : vector<8x8xf32> to vector<8x8xbf16>
    %87 = vector.extract_strided_slice %37 {offsets = [0, 80], sizes = [8, 8], strides = [1, 1]} : vector<8x96xf32> to vector<8x8xf32>
    %88 = arith.truncf %87 : vector<8x8xf32> to vector<8x8xbf16>
    %cst_29 = arith.constant dense<0.000000e+00> : vector<8x8xf32>
    %89 = tpu.matmul %84, %86, %cst_29 {dimension_numbers = #tpu.dot_dimension_numbers<[1], [1], [0], [0], [0, 0, 1, 0], [], []>} : vector<8x8xbf16>, vector<8x8xbf16>, vector<8x8xf32> -> vector<8x8xf32>
    %cst_30 = arith.constant -1.000000e+30 : f32
    %90 = vector.broadcast %cst_30 : f32 to vector<8x8xf32>
    %91 = arith.select %40, %89, %90 : vector<8x8xi1>, vector<8x8xf32>
    %cst_31 = arith.constant dense<0xFF800000> : vector<8xf32>
    %92 = vector.multi_reduction <maximumf>, %91, %cst_31 [1] : vector<8x8xf32> to vector<8xf32>
    %93 = vector.shape_cast %92 : vector<8xf32> to vector<8x1xf32>
    %94 = vector.broadcast %93 : vector<8x1xf32> to vector<8x8xf32>
    %95 = arith.subf %91, %94 : vector<8x8xf32>
    %96 = math.exp %95 : vector<8x8xf32>
    %cst_32 = arith.constant dense<0.000000e+00> : vector<8xf32>
    %97 = vector.multi_reduction <add>, %96, %cst_32 [1] : vector<8x8xf32> to vector<8xf32>
    %98 = vector.shape_cast %97 : vector<8xf32> to vector<8x1xf32>
    %99 = tpu.reciprocal %98 {approx = true} : vector<8x1xf32> -> vector<8x1xf32>
    %100 = vector.broadcast %99 : vector<8x1xf32> to vector<8x8xf32>
    %101 = arith.mulf %96, %100 : vector<8x8xf32>
    %102 = arith.truncf %101 : vector<8x8xf32> to vector<8x8xbf16>
    %cst_33 = arith.constant dense<0.000000e+00> : vector<8x8xf32>
    %103 = tpu.matmul %102, %88, %cst_33 {dimension_numbers = #tpu.dot_dimension_numbers<[1], [0], [0], [1], [0, 0, 1, 1], [], []>} : vector<8x8xbf16>, vector<8x8xbf16>, vector<8x8xf32> -> vector<8x8xf32>
    %104 = vector.extract_strided_slice %37 {offsets = [0, 24], sizes = [8, 8], strides = [1, 1]} : vector<8x96xf32> to vector<8x8xf32>
    %105 = arith.truncf %104 : vector<8x8xf32> to vector<8x8xbf16>
    %106 = vector.extract_strided_slice %37 {offsets = [0, 56], sizes = [8, 8], strides = [1, 1]} : vector<8x96xf32> to vector<8x8xf32>
    %107 = arith.truncf %106 : vector<8x8xf32> to vector<8x8xbf16>
    %108 = vector.extract_strided_slice %37 {offsets = [0, 88], sizes = [8, 8], strides = [1, 1]} : vector<8x96xf32> to vector<8x8xf32>
    %109 = arith.truncf %108 : vector<8x8xf32> to vector<8x8xbf16>
    %cst_34 = arith.constant dense<0.000000e+00> : vector<8x8xf32>
    %110 = tpu.matmul %105, %107, %cst_34 {dimension_numbers = #tpu.dot_dimension_numbers<[1], [1], [0], [0], [0, 0, 1, 0], [], []>} : vector<8x8xbf16>, vector<8x8xbf16>, vector<8x8xf32> -> vector<8x8xf32>
    %cst_35 = arith.constant -1.000000e+30 : f32
    %111 = vector.broadcast %cst_35 : f32 to vector<8x8xf32>
    %112 = arith.select %40, %110, %111 : vector<8x8xi1>, vector<8x8xf32>
    %cst_36 = arith.constant dense<0xFF800000> : vector<8xf32>
    %113 = vector.multi_reduction <maximumf>, %112, %cst_36 [1] : vector<8x8xf32> to vector<8xf32>
    %114 = vector.shape_cast %113 : vector<8xf32> to vector<8x1xf32>
    %115 = vector.broadcast %114 : vector<8x1xf32> to vector<8x8xf32>
    %116 = arith.subf %112, %115 : vector<8x8xf32>
    %117 = math.exp %116 : vector<8x8xf32>
    %cst_37 = arith.constant dense<0.000000e+00> : vector<8xf32>
    %118 = vector.multi_reduction <add>, %117, %cst_37 [1] : vector<8x8xf32> to vector<8xf32>
    %119 = vector.shape_cast %118 : vector<8xf32> to vector<8x1xf32>
    %120 = tpu.reciprocal %119 {approx = true} : vector<8x1xf32> -> vector<8x1xf32>
    %121 = vector.broadcast %120 : vector<8x1xf32> to vector<8x8xf32>
    %122 = arith.mulf %117, %121 : vector<8x8xf32>
    %123 = arith.truncf %122 : vector<8x8xf32> to vector<8x8xbf16>
    %cst_38 = arith.constant dense<0.000000e+00> : vector<8x8xf32>
    %124 = tpu.matmul %123, %109, %cst_38 {dimension_numbers = #tpu.dot_dimension_numbers<[1], [0], [0], [1], [0, 0, 1, 1], [], []>} : vector<8x8xbf16>, vector<8x8xbf16>, vector<8x8xf32> -> vector<8x8xf32>
    %125 = tpu.concatenate %61, %82, %103, %124 in 1 : vector<8x8xf32>, vector<8x8xf32>, vector<8x8xf32>, vector<8x8xf32> -> vector<8x32xf32>
    %126 = arith.truncf %125 : vector<8x32xf32> to vector<8x32xbf16>
    %c0_39 = arith.constant 0 : index
    %c0_40 = arith.constant 0 : index
    %c0_41 = arith.constant 0 : index
    %127 = vector.load %arg7[%c0_39, %c0_40, %c0_41] : memref<1x32x32xbf16, #tpu.memory_space<vmem>>, vector<1x32x32xbf16>
    %128 = vector.shape_cast %127 : vector<1x32x32xbf16> to vector<32x32xbf16>
    %cst_42 = arith.constant dense<0.000000e+00> : vector<8x32xf32>
    %129 = tpu.matmul %126, %128, %cst_42 {dimension_numbers = #tpu.dot_dimension_numbers<[1], [0], [0], [1], [0, 0, 1, 1], [], []>} : vector<8x32xbf16>, vector<32x32xbf16>, vector<8x32xf32> -> vector<8x32xf32>
    %c0_43 = arith.constant 0 : index
    %c0_44 = arith.constant 0 : index
    %c0_45 = arith.constant 0 : index
    %130 = vector.load %arg8[%c0_43, %c0_44, %c0_45] : memref<1x1x32xf32, #tpu.memory_space<vmem>>, vector<1x1x32xf32>
    %131 = vector.shape_cast %130 : vector<1x1x32xf32> to vector<1x32xf32>
    %132 = vector.broadcast %131 : vector<1x32xf32> to vector<8x32xf32>
    %133 = arith.addf %129, %132 : vector<8x32xf32>
    %134 = arith.addf %3, %133 : vector<8x32xf32>
    %c0_46 = arith.constant 0 : index
    %c0_47 = arith.constant 0 : index
    %c0_48 = arith.constant 0 : index
    %135 = vector.load %arg9[%c0_46, %c0_47, %c0_48] : memref<1x1x32xf32, #tpu.memory_space<vmem>>, vector<1x1x32xf32>
    %136 = vector.shape_cast %135 : vector<1x1x32xf32> to vector<1x32xf32>
    %c0_49 = arith.constant 0 : index
    %c0_50 = arith.constant 0 : index
    %c0_51 = arith.constant 0 : index
    %137 = vector.load %arg10[%c0_49, %c0_50, %c0_51] : memref<1x1x32xf32, #tpu.memory_space<vmem>>, vector<1x1x32xf32>
    %138 = vector.shape_cast %137 : vector<1x1x32xf32> to vector<1x32xf32>
    %cst_52 = arith.constant dense<0.000000e+00> : vector<8xf32>
    %139 = vector.multi_reduction <add>, %134, %cst_52 [1] : vector<8x32xf32> to vector<8xf32>
    %140 = vector.shape_cast %139 : vector<8xf32> to vector<8x1xf32>
    %cst_53 = arith.constant 3.200000e+01 : f32
    %141 = vector.broadcast %cst_53 : f32 to vector<8x1xf32>
    %142 = arith.divf %140, %141 : vector<8x1xf32>
    %143 = vector.broadcast %142 : vector<8x1xf32> to vector<8x32xf32>
    %144 = arith.subf %134, %143 : vector<8x32xf32>
    %145 = arith.mulf %144, %144 : vector<8x32xf32>
    %cst_54 = arith.constant dense<0.000000e+00> : vector<8xf32>
    %146 = vector.multi_reduction <add>, %145, %cst_54 [1] : vector<8x32xf32> to vector<8xf32>
    %147 = vector.shape_cast %146 : vector<8xf32> to vector<8x1xf32>
    %cst_55 = arith.constant 3.200000e+01 : f32
    %148 = vector.broadcast %cst_55 : f32 to vector<8x1xf32>
    %149 = arith.divf %147, %148 : vector<8x1xf32>
    %150 = vector.broadcast %142 : vector<8x1xf32> to vector<8x32xf32>
    %151 = arith.subf %134, %150 : vector<8x32xf32>
    %cst_56 = arith.constant 9.99999974E-6 : f32
    %152 = vector.broadcast %cst_56 : f32 to vector<8x1xf32>
    %153 = arith.addf %149, %152 : vector<8x1xf32>
    %154 = math.rsqrt %153 : vector<8x1xf32>
    %155 = vector.broadcast %154 : vector<8x1xf32> to vector<8x32xf32>
    %156 = arith.mulf %151, %155 : vector<8x32xf32>
    %157 = vector.broadcast %136 : vector<1x32xf32> to vector<8x32xf32>
    %158 = arith.mulf %156, %157 : vector<8x32xf32>
    %159 = vector.broadcast %138 : vector<1x32xf32> to vector<8x32xf32>
    %160 = arith.addf %158, %159 : vector<8x32xf32>
    %161 = arith.truncf %160 : vector<8x32xf32> to vector<8x32xbf16>
    %c0_57 = arith.constant 0 : index
    %c0_58 = arith.constant 0 : index
    %c0_59 = arith.constant 0 : index
    %162 = vector.load %arg11[%c0_57, %c0_58, %c0_59] : memref<1x32x128xbf16, #tpu.memory_space<vmem>>, vector<1x32x128xbf16>
    %163 = vector.shape_cast %162 : vector<1x32x128xbf16> to vector<32x128xbf16>
    %cst_60 = arith.constant dense<0.000000e+00> : vector<8x128xf32>
    %164 = tpu.matmul %161, %163, %cst_60 {dimension_numbers = #tpu.dot_dimension_numbers<[1], [0], [0], [1], [0, 0, 1, 1], [], []>} : vector<8x32xbf16>, vector<32x128xbf16>, vector<8x128xf32> -> vector<8x128xf32>
    %c0_61 = arith.constant 0 : index
    %c0_62 = arith.constant 0 : index
    %c0_63 = arith.constant 0 : index
    %165 = vector.load %arg12[%c0_61, %c0_62, %c0_63] : memref<1x1x128xf32, #tpu.memory_space<vmem>>, vector<1x1x128xf32>
    %166 = vector.shape_cast %165 : vector<1x1x128xf32> to vector<1x128xf32>
    %167 = vector.broadcast %166 : vector<1x128xf32> to vector<8x128xf32>
    %168 = arith.addf %164, %167 : vector<8x128xf32>
    %cst_64 = arith.constant 1.702000e+00 : f32
    %169 = vector.broadcast %cst_64 : f32 to vector<8x128xf32>
    %170 = arith.mulf %169, %168 : vector<8x128xf32>
    %171 = arith.negf %170 : vector<8x128xf32>
    %172 = math.exp %171 : vector<8x128xf32>
    %cst_65 = arith.constant 1.000000e+00 : f32
    %173 = vector.broadcast %cst_65 : f32 to vector<8x128xf32>
    %174 = arith.addf %173, %172 : vector<8x128xf32>
    %175 = arith.divf %173, %174 : vector<8x128xf32>
    %176 = arith.mulf %168, %175 : vector<8x128xf32>
    %177 = arith.truncf %176 : vector<8x128xf32> to vector<8x128xbf16>
    %c0_66 = arith.constant 0 : index
    %c0_67 = arith.constant 0 : index
    %c0_68 = arith.constant 0 : index
    %178 = vector.load %arg13[%c0_66, %c0_67, %c0_68] : memref<1x128x32xbf16, #tpu.memory_space<vmem>>, vector<1x128x32xbf16>
    %179 = vector.shape_cast %178 : vector<1x128x32xbf16> to vector<128x32xbf16>
    %cst_69 = arith.constant dense<0.000000e+00> : vector<8x32xf32>
    %180 = tpu.matmul %177, %179, %cst_69 {dimension_numbers = #tpu.dot_dimension_numbers<[1], [0], [0], [1], [0, 0, 1, 1], [], []>} : vector<8x128xbf16>, vector<128x32xbf16>, vector<8x32xf32> -> vector<8x32xf32>
    %c0_70 = arith.constant 0 : index
    %c0_71 = arith.constant 0 : index
    %c0_72 = arith.constant 0 : index
    %181 = vector.load %arg14[%c0_70, %c0_71, %c0_72] : memref<1x1x32xf32, #tpu.memory_space<vmem>>, vector<1x1x32xf32>
    %182 = vector.shape_cast %181 : vector<1x1x32xf32> to vector<1x32xf32>
    %183 = vector.broadcast %182 : vector<1x32xf32> to vector<8x32xf32>
    %184 = arith.addf %180, %183 : vector<8x32xf32>
    %185 = arith.addf %134, %184 : vector<8x32xf32>
    %c0_73 = arith.constant 0 : index
    %c0_74 = arith.constant 0 : index
    %186 = vector.load %arg18[%c0_73, %c0_74] : memref<8x32xf32, #tpu.memory_space<vmem>>, vector<8x32xf32>
    tpu.vector_store %arg18[%c0_73, %c0_74], %185 {strides = array<i32>} : memref<8x32xf32, #tpu.memory_space<vmem>>, vector<8x32xf32>,
    %c1_i32 = arith.constant 1 : i32
    %187 = arith.cmpi eq, %arg1, %c1_i32 : i32
    %188 = arith.extui %187 : i1 to i32
    %c0_i32_75 = arith.constant 0 : i32
    %189 = arith.cmpi ne, %188, %c0_i32_75 : i32
    scf.if %189 {
      %c0_76 = arith.constant 0 : index
      %c0_77 = arith.constant 0 : index
      %190 = vector.load %arg15[%c0_76, %c0_77] : memref<1x32xf32, #tpu.memory_space<vmem>>, vector<1x32xf32>
      %c0_78 = arith.constant 0 : index
      %c0_79 = arith.constant 0 : index
      %191 = vector.load %arg16[%c0_78, %c0_79] : memref<1x32xf32, #tpu.memory_space<vmem>>, vector<1x32xf32>
      %cst_80 = arith.constant dense<0.000000e+00> : vector<8xf32>
      %192 = vector.multi_reduction <add>, %185, %cst_80 [1] : vector<8x32xf32> to vector<8xf32>
      %193 = vector.shape_cast %192 : vector<8xf32> to vector<8x1xf32>
      %cst_81 = arith.constant 3.200000e+01 : f32
      %194 = vector.broadcast %cst_81 : f32 to vector<8x1xf32>
      %195 = arith.divf %193, %194 : vector<8x1xf32>
      %196 = vector.broadcast %195 : vector<8x1xf32> to vector<8x32xf32>
      %197 = arith.subf %185, %196 : vector<8x32xf32>
      %198 = arith.mulf %197, %197 : vector<8x32xf32>
      %cst_82 = arith.constant dense<0.000000e+00> : vector<8xf32>
      %199 = vector.multi_reduction <add>, %198, %cst_82 [1] : vector<8x32xf32> to vector<8xf32>
      %200 = vector.shape_cast %199 : vector<8xf32> to vector<8x1xf32>
      %cst_83 = arith.constant 3.200000e+01 : f32
      %201 = vector.broadcast %cst_83 : f32 to vector<8x1xf32>
      %202 = arith.divf %200, %201 : vector<8x1xf32>
      %203 = vector.broadcast %195 : vector<8x1xf32> to vector<8x32xf32>
      %204 = arith.subf %185, %203 : vector<8x32xf32>
      %cst_84 = arith.constant 9.99999974E-6 : f32
      %205 = vector.broadcast %cst_84 : f32 to vector<8x1xf32>
      %206 = arith.addf %202, %205 : vector<8x1xf32>
      %207 = math.rsqrt %206 : vector<8x1xf32>
      %208 = vector.broadcast %207 : vector<8x1xf32> to vector<8x32xf32>
      %209 = arith.mulf %204, %208 : vector<8x32xf32>
      %210 = vector.broadcast %190 : vector<1x32xf32> to vector<8x32xf32>
      %211 = arith.mulf %209, %210 : vector<8x32xf32>
      %212 = vector.broadcast %191 : vector<1x32xf32> to vector<8x32xf32>
      %213 = arith.addf %211, %212 : vector<8x32xf32>
      %c0_85 = arith.constant 0 : index
      %c0_86 = arith.constant 0 : index
      %c0_87 = arith.constant 0 : index
      %214 = vector.load %arg17[%c0_85, %c0_86, %c0_87] : memref<1x8x32xf32, #tpu.memory_space<vmem>>, vector<1x8x32xf32>
      %215 = vector.shape_cast %214 : vector<1x8x32xf32> to vector<8x32xf32>
      %216 = vector.shape_cast %213 : vector<8x32xf32> to vector<1x8x32xf32>
      tpu.vector_store %arg17[%c0_85, %c0_86, %c0_87], %216 {strides = array<i32>} : memref<1x8x32xf32, #tpu.memory_space<vmem>>, vector<1x8x32xf32>,
    } else {
    }
    return
  }
  func.func @transform_0(%arg0: i32, %arg1: i32) -> (i32, i32, i32) {
    %c0_i32 = arith.constant 0 : i32
    %c0_i32_0 = arith.constant 0 : i32
    %c0_i32_1 = arith.constant 0 : i32
    return %arg0, %c0_i32, %c0_i32_0 : i32, i32, i32
  }
  func.func @transform_1(%arg0: i32, %arg1: i32) -> (i32, i32, i32) {
    %c0_i32 = arith.constant 0 : i32
    %c0_i32_0 = arith.constant 0 : i32
    %c0_i32_1 = arith.constant 0 : i32
    return %arg1, %c0_i32, %c0_i32_0 : i32, i32, i32
  }
  func.func @transform_2(%arg0: i32, %arg1: i32) -> (i32, i32, i32) {
    %c0_i32 = arith.constant 0 : i32
    %c0_i32_0 = arith.constant 0 : i32
    %c0_i32_1 = arith.constant 0 : i32
    return %arg1, %c0_i32, %c0_i32_0 : i32, i32, i32
  }
  func.func @transform_3(%arg0: i32, %arg1: i32) -> (i32, i32, i32) {
    %c0_i32 = arith.constant 0 : i32
    %c0_i32_0 = arith.constant 0 : i32
    %c0_i32_1 = arith.constant 0 : i32
    return %arg1, %c0_i32, %c0_i32_0 : i32, i32, i32
  }
  func.func @transform_4(%arg0: i32, %arg1: i32) -> (i32, i32, i32) {
    %c0_i32 = arith.constant 0 : i32
    %c0_i32_0 = arith.constant 0 : i32
    %c0_i32_1 = arith.constant 0 : i32
    return %arg1, %c0_i32, %c0_i32_0 : i32, i32, i32
  }
  func.func @transform_5(%arg0: i32, %arg1: i32) -> (i32, i32, i32) {
    %c0_i32 = arith.constant 0 : i32
    %c0_i32_0 = arith.constant 0 : i32
    %c0_i32_1 = arith.constant 0 : i32
    return %arg1, %c0_i32, %c0_i32_0 : i32, i32, i32
  }
  func.func @transform_6(%arg0: i32, %arg1: i32) -> (i32, i32, i32) {
    %c0_i32 = arith.constant 0 : i32
    %c0_i32_0 = arith.constant 0 : i32
    %c0_i32_1 = arith.constant 0 : i32
    return %arg1, %c0_i32, %c0_i32_0 : i32, i32, i32
  }
  func.func @transform_7(%arg0: i32, %arg1: i32) -> (i32, i32, i32) {
    %c0_i32 = arith.constant 0 : i32
    %c0_i32_0 = arith.constant 0 : i32
    %c0_i32_1 = arith.constant 0 : i32
    return %arg1, %c0_i32, %c0_i32_0 : i32, i32, i32
  }
  func.func @transform_8(%arg0: i32, %arg1: i32) -> (i32, i32, i32) {
    %c0_i32 = arith.constant 0 : i32
    %c0_i32_0 = arith.constant 0 : i32
    %c0_i32_1 = arith.constant 0 : i32
    return %arg1, %c0_i32, %c0_i32_0 : i32, i32, i32
  }
  func.func @transform_9(%arg0: i32, %arg1: i32) -> (i32, i32, i32) {
    %c0_i32 = arith.constant 0 : i32
    %c0_i32_0 = arith.constant 0 : i32
    %c0_i32_1 = arith.constant 0 : i32
    return %arg1, %c0_i32, %c0_i32_0 : i32, i32, i32
  }
  func.func @transform_10(%arg0: i32, %arg1: i32) -> (i32, i32, i32) {
    %c0_i32 = arith.constant 0 : i32
    %c0_i32_0 = arith.constant 0 : i32
    %c0_i32_1 = arith.constant 0 : i32
    return %arg1, %c0_i32, %c0_i32_0 : i32, i32, i32
  }
  func.func @transform_11(%arg0: i32, %arg1: i32) -> (i32, i32, i32) {
    %c0_i32 = arith.constant 0 : i32
    %c0_i32_0 = arith.constant 0 : i32
    %c0_i32_1 = arith.constant 0 : i32
    return %arg1, %c0_i32, %c0_i32_0 : i32, i32, i32
  }
  func.func @transform_12(%arg0: i32, %arg1: i32) -> (i32, i32, i32) {
    %c0_i32 = arith.constant 0 : i32
    %c0_i32_0 = arith.constant 0 : i32
    %c0_i32_1 = arith.constant 0 : i32
    return %arg1, %c0_i32, %c0_i32_0 : i32, i32, i32
  }
  func.func @transform_13(%arg0: i32, %arg1: i32) -> (i32, i32) {
    %c0_i32 = arith.constant 0 : i32
    %c0_i32_0 = arith.constant 0 : i32
    %c0_i32_1 = arith.constant 0 : i32
    return %c0_i32, %c0_i32_0 : i32, i32
  }
  func.func @transform_14(%arg0: i32, %arg1: i32) -> (i32, i32) {
    %c0_i32 = arith.constant 0 : i32
    %c0_i32_0 = arith.constant 0 : i32
    %c0_i32_1 = arith.constant 0 : i32
    return %c0_i32, %c0_i32_0 : i32, i32
  }
  func.func @transform_15(%arg0: i32, %arg1: i32) -> (i32, i32, i32) {
    %c0_i32 = arith.constant 0 : i32
    %c0_i32_0 = arith.constant 0 : i32
    %c0_i32_1 = arith.constant 0 : i32
    return %arg0, %c0_i32, %c0_i32_0 : i32, i32, i32
  }
}

</mosaic_0001>

<llo_original>
// kernel: frozen_clip_embed.1
$region0: #{frozen_clip_embed.1}
  #allocation0 [shape = 'u32[]', space=smem, size = 0x4, offset = 0x4, fixed_abs, tag = 'smem constant byte address 0x4 - core index']
  #allocation1 [shape = 'u32[144,128]{1,0:T(1,128)}', space=vmem, size = 0x12000, scoped, tag = 'internal scratch']
  #allocation2 [shape = 'f32[8,32]{1,0:T(8,128)}', space=vmem, size = 0x1000, scoped, tag = 'scratch operand']
  %s0 = inlined_call_operand.vmem [shape: f32[2,8,32], index: 0, kind: input, shape index: {}]
  %s1 = inlined_call_operand.vmem [shape: f32[2,1,32], index: 1, kind: input, shape index: {}]
  %s2 = inlined_call_operand.vmem [shape: f32[2,1,32], index: 2, kind: input, shape index: {}]
  %s3 = inlined_call_operand.vmem [shape: bf16[2,32,96], index: 3, kind: input, shape index: {}]
  %s4 = inlined_call_operand.vmem [shape: f32[2,1,96], index: 4, kind: input, shape index: {}]
  %s5 = inlined_call_operand.vmem [shape: bf16[2,32,32], index: 5, kind: input, shape index: {}]
  %s6 = inlined_call_operand.vmem [shape: f32[2,1,32], index: 6, kind: input, shape index: {}]
  %s7 = inlined_call_operand.vmem [shape: f32[2,1,32], index: 7, kind: input, shape index: {}]
  %s8 = inlined_call_operand.vmem [shape: f32[2,1,32], index: 8, kind: input, shape index: {}]
  %s9 = inlined_call_operand.vmem [shape: bf16[2,32,128], index: 9, kind: input, shape index: {}]
  %s10 = inlined_call_operand.vmem [shape: f32[2,1,128], index: 10, kind: input, shape index: {}]
  %s11 = inlined_call_operand.vmem [shape: bf16[2,128,32], index: 11, kind: input, shape index: {}]
  %s12 = inlined_call_operand.vmem [shape: f32[2,1,32], index: 12, kind: input, shape index: {}]
  %s13 = inlined_call_operand.vmem [shape: f32[1,32], index: 13, kind: input, shape index: {}]
  %s14 = inlined_call_operand.vmem [shape: f32[1,32], index: 14, kind: input, shape index: {}]
  %s15 = inlined_call_operand.hbm [shape: f32[2,8,32], index: 15, kind: output, shape index: {}]
  %s16 = sld [smem:[#allocation0]]
  $region101: #{frozen_clip_embed.1} parent=0
    _
  %s18 = ssub.s32 1, %s16
  %s19 = scalar_select 0, %s18, %s16
  $region1: #{frozen_clip_embed.1} parent=0
    #allocation3 [shape = 'u8[8192]{0}', space=vmem, size = 0x2000, scoped, tag = 'output window, operand 0']
    #allocation4 [shape = 's32[2]{0}', space=sflag, size = 0x8, scoped, tag = 'scoped memory for frozen_clip_embed.1']
    %20 = vsyncpa [#allocation4], 0
    %s21 = scalar_lea.sflag [#allocation4], 1
    %22 = vsyncpa %s21, 0
    loop: start=0, step=1, limit=6
    $region2: #{frozen_clip_embed.1} parent=1 // loop_pre_header
      _
    $region3: #{frozen_clip_embed.1} parent=1 // loop_header
      %s24 = sphi 0, %s28
      %p25 = scmp.ge.s32.totalorder %s24, 6
      %s31 = sphi 0, %s43
      %s32 = sphi 0, %s39
      %s33 = sphi 0, %s31
      %s34 = sphi 0, %s32
      %s35 = sphi 0, %s33
      %s36 = sphi 0, %s34
      %s46 = sphi 0, %s48
      %s49 = sphi 0, %s46
      %s50 = sphi 0, %s49
      %s66 = sphi 0, %s50
      %s72 = sphi 0, %s74
      %s75 = sphi 0, %s72
      %s76 = sphi 0, %s75
      %s92 = sphi 0, %s76
      %s98 = sphi 0, %s100
      %s101 = sphi 0, %s98
      %s102 = sphi 0, %s101
      %s118 = sphi 0, %s102
      %s124 = sphi 0, %s126
      %s127 = sphi 0, %s124
      %s128 = sphi 0, %s127
      %s144 = sphi 0, %s128
      %s150 = sphi 0, %s152
      %s153 = sphi 0, %s150
      %s154 = sphi 0, %s153
      %s170 = sphi 0, %s154
      %s176 = sphi 0, %s178
      %s179 = sphi 0, %s176
      %s180 = sphi 0, %s179
      %s196 = sphi 0, %s180
      %s202 = sphi 0, %s204
      %s205 = sphi 0, %s202
      %s206 = sphi 0, %s205
      %s222 = sphi 0, %s206
      %s228 = sphi 0, %s230
      %s231 = sphi 0, %s228
      %s232 = sphi 0, %s231
      %s248 = sphi 0, %s232
      %s254 = sphi 0, %s256
      %s257 = sphi 0, %s254
      %s258 = sphi 0, %s257
      %s274 = sphi 0, %s258
      %s280 = sphi 0, %s282
      %s283 = sphi 0, %s280
      %s284 = sphi 0, %s283
      %s300 = sphi 0, %s284
      %s306 = sphi 0, %s308
      %s309 = sphi 0, %s306
      %s310 = sphi 0, %s309
      %s326 = sphi 0, %s310
      %s332 = sphi 0, %s334
      %s335 = sphi 0, %s332
      %s336 = sphi 0, %s335
      %s352 = sphi 0, %s336
      %s358 = sphi 0, %s360
      %s361 = sphi 0, %s358
      %s362 = sphi 0, %s361
      %s378 = sphi 0, %s362
      %s382 = sphi 0, %s382
      %s384 = sphi 0, %s382
      %s385 = sphi 0, %s384
      %s399 = sphi 0, %s385
      %s403 = sphi 0, %s403
      %s405 = sphi 0, %s403
      %s406 = sphi 0, %s405
      %s420 = sphi 0, %s406
      %s426 = sphi 0, %s428
      %s429 = sphi 0, %s426
      %s430 = sphi 0, %s429
      %s446 = sphi 0, %s430
    $region4: #{frozen_clip_embed.1} parent=1 // loop_header_branch
      %27 = sbr.rel (%p25) target = $region8
    $region5: #{frozen_clip_embed.1} parent=1 // loop_body
      %s29 = ssub.s32 %s24, 1
      %s30 = ssub.s32 %s24, 2
      %s37 = sadd.s32 1, %s32
      %p38 = scmp.ge.s32.totalorder %s37, 2
      %s39 = scalar_select %p38, 0, %s37
      %s40 = sadd.s32 1, %s31
      %s41 = scalar_select %p38, %s40, %s31
      %p42 = scmp.ge.s32.totalorder %s41, 2
      %s43 = scalar_select %p42, 0, %s41
      %s44 = ssub.s32 %s31, %s43
      %p45 = scmp.eq.s32.totalorder %s44, 0
      %s47 = sadd.s32 %s46, 1
      %s48 = scalar_select %p45, %s46, %s47
      %p51 = pneg %p45
      %p52 = scmp.eq.s32.totalorder %s24, 3
      %p53 = por %p51, %p52
      %p54 = scmp.ne.s32.totalorder %s46, %s49
      %p55 = scmp.eq.s32.totalorder %s24, 0
      %p56 = por %p54, %p55
      %p57 = scmp.ne.s32.totalorder %s46, %s49
      %p58 = scmp.eq.s32.totalorder %s29, 3
      %p59 = por %p57, %p58
      %p60 = scmp.ne.s32.totalorder %s49, %s50
      %p61 = scmp.eq.s32.totalorder %s29, 0
      %p62 = por %p60, %p61
      %p63 = scmp.ne.s32.totalorder %s49, %s50
      %p64 = scmp.eq.s32.totalorder %s30, 3
      %p65 = por %p63, %p64
      %p67 = scmp.ne.s32.totalorder %s50, %s66
      %p68 = scmp.eq.s32.totalorder %s30, 0
      %p69 = por %p67, %p68
      %s70 = ssub.s32 %s32, %s39
      %p71 = scmp.eq.s32.totalorder %s70, 0
      %s73 = sadd.s32 %s72, 1
      %s74 = scalar_select %p71, %s72, %s73
      %p77 = pneg %p71
      %p78 = scmp.eq.s32.totalorder %s24, 3
      %p79 = por %p77, %p78
      %p80 = scmp.ne.s32.totalorder %s72, %s75
      %p81 = scmp.eq.s32.totalorder %s24, 0
      %p82 = por %p80, %p81
      %p83 = scmp.ne.s32.totalorder %s72, %s75
      %p84 = scmp.eq.s32.totalorder %s29, 3
      %p85 = por %p83, %p84
      %p86 = scmp.ne.s32.totalorder %s75, %s76
      %p87 = scmp.eq.s32.totalorder %s29, 0
      %p88 = por %p86, %p87
      %p89 = scmp.ne.s32.totalorder %s75, %s76
      %p90 = scmp.eq.s32.totalorder %s30, 3
      %p91 = por %p89, %p90
      %p93 = scmp.ne.s32.totalorder %s76, %s92
      %p94 = scmp.eq.s32.totalorder %s30, 0
      %p95 = por %p93, %p94
      %s96 = ssub.s32 %s32, %s39
      %p97 = scmp.eq.s32.totalorder %s96, 0
      %s99 = sadd.s32 %s98, 1
      %s100 = scalar_select %p97, %s98, %s99
      %p103 = pneg %p97
      %p104 = scmp.eq.s32.totalorder %s24, 3
      %p105 = por %p103, %p104
      %p106 = scmp.ne.s32.totalorder %s98, %s101
      %p107 = scmp.eq.s32.totalorder %s24, 0
      %p108 = por %p106, %p107
      %p109 = scmp.ne.s32.totalorder %s98, %s101
      %p110 = scmp.eq.s32.totalorder %s29, 3
      %p111 = por %p109, %p110
      %p112 = scmp.ne.s32.totalorder %s101, %s102
      %p113 = scmp.eq.s32.totalorder %s29, 0
      %p114 = por %p112, %p113
      %p115 = scmp.ne.s32.totalorder %s101, %s102
      %p116 = scmp.eq.s32.totalorder %s30, 3
      %p117 = por %p115, %p116
      %p119 = scmp.ne.s32.totalorder %s102, %s118
      %p120 = scmp.eq.s32.totalorder %s30, 0
      %p121 = por %p119, %p120
      %s122 = ssub.s32 %s32, %s39
      %p123 = scmp.eq.s32.totalorder %s122, 0
      %s125 = sadd.s32 %s124, 1
      %s126 = scalar_select %p123, %s124, %s125
      %p129 = pneg %p123
      %p130 = scmp.eq.s32.totalorder %s24, 3
      %p131 = por %p129, %p130
      %p132 = scmp.ne.s32.totalorder %s124, %s127
      %p133 = scmp.eq.s32.totalorder %s24, 0
      %p134 = por %p132, %p133
      %p135 = scmp.ne.s32.totalorder %s124, %s127
      %p136 = scmp.eq.s32.totalorder %s29, 3
      %p137 = por %p135, %p136
      %p138 = scmp.ne.s32.totalorder %s127, %s128
      %p139 = scmp.eq.s32.totalorder %s29, 0
      %p140 = por %p138, %p139
      %p141 = scmp.ne.s32.totalorder %s127, %s128
      %p142 = scmp.eq.s32.totalorder %s30, 3
      %p143 = por %p141, %p142
      %p145 = scmp.ne.s32.totalorder %s128, %s144
      %p146 = scmp.eq.s32.totalorder %s30, 0
      %p147 = por %p145, %p146
      %s148 = ssub.s32 %s32, %s39
      %p149 = scmp.eq.s32.totalorder %s148, 0
      %s151 = sadd.s32 %s150, 1
      %s152 = scalar_select %p149, %s150, %s151
      %p155 = pneg %p149
      %p156 = scmp.eq.s32.totalorder %s24, 3
      %p157 = por %p155, %p156
      %p158 = scmp.ne.s32.totalorder %s150, %s153
      %p159 = scmp.eq.s32.totalorder %s24, 0
      %p160 = por %p158, %p159
      %p161 = scmp.ne.s32.totalorder %s150, %s153
      %p162 = scmp.eq.s32.totalorder %s29, 3
      %p163 = por %p161, %p162
      %p164 = scmp.ne.s32.totalorder %s153, %s154
      %p165 = scmp.eq.s32.totalorder %s29, 0
      %p166 = por %p164, %p165
      %p167 = scmp.ne.s32.totalorder %s153, %s154
      %p168 = scmp.eq.s32.totalorder %s30, 3
      %p169 = por %p167, %p168
      %p171 = scmp.ne.s32.totalorder %s154, %s170
      %p172 = scmp.eq.s32.totalorder %s30, 0
      %p173 = por %p171, %p172
      %s174 = ssub.s32 %s32, %s39
      %p175 = scmp.eq.s32.totalorder %s174, 0
      %s177 = sadd.s32 %s176, 1
      %s178 = scalar_select %p175, %s176, %s177
      %p181 = pneg %p175
      %p182 = scmp.eq.s32.totalorder %s24, 3
      %p183 = por %p181, %p182
      %p184 = scmp.ne.s32.totalorder %s176, %s179
      %p185 = scmp.eq.s32.totalorder %s24, 0
      %p186 = por %p184, %p185
      %p187 = scmp.ne.s32.totalorder %s176, %s179
      %p188 = scmp.eq.s32.totalorder %s29, 3
      %p189 = por %p187, %p188
      %p190 = scmp.ne.s32.totalorder %s179, %s180
      %p191 = scmp.eq.s32.totalorder %s29, 0
      %p192 = por %p190, %p191
      %p193 = scmp.ne.s32.totalorder %s179, %s180
      %p194 = scmp.eq.s32.totalorder %s30, 3
      %p195 = por %p193, %p194
      %p197 = scmp.ne.s32.totalorder %s180, %s196
      %p198 = scmp.eq.s32.totalorder %s30, 0
      %p199 = por %p197, %p198
      %s200 = ssub.s32 %s32, %s39
      %p201 = scmp.eq.s32.totalorder %s200, 0
      %s203 = sadd.s32 %s202, 1
      %s204 = scalar_select %p201, %s202, %s203
      %p207 = pneg %p201
      %p208 = scmp.eq.s32.totalorder %s24, 3
      %p209 = por %p207, %p208
      %p210 = scmp.ne.s32.totalorder %s202, %s205
      %p211 = scmp.eq.s32.totalorder %s24, 0
      %p212 = por %p210, %p211
      %p213 = scmp.ne.s32.totalorder %s202, %s205
      %p214 = scmp.eq.s32.totalorder %s29, 3
      %p215 = por %p213, %p214
      %p216 = scmp.ne.s32.totalorder %s205, %s206
      %p217 = scmp.eq.s32.totalorder %s29, 0
      %p218 = por %p216, %p217
      %p219 = scmp.ne.s32.totalorder %s205, %s206
      %p220 = scmp.eq.s32.totalorder %s30, 3
      %p221 = por %p219, %p220
      %p223 = scmp.ne.s32.totalorder %s206, %s222
      %p224 = scmp.eq.s32.totalorder %s30, 0
      %p225 = por %p223, %p224
      %s226 = ssub.s32 %s32, %s39
      %p227 = scmp.eq.s32.totalorder %s226, 0
      %s229 = sadd.s32 %s228, 1
      %s230 = scalar_select %p227, %s228, %s229
      %p233 = pneg %p227
      %p234 = scmp.eq.s32.totalorder %s24, 3
      %p235 = por %p233, %p234
      %p236 = scmp.ne.s32.totalorder %s228, %s231
      %p237 = scmp.eq.s32.totalorder %s24, 0
      %p238 = por %p236, %p237
      %p239 = scmp.ne.s32.totalorder %s228, %s231
      %p240 = scmp.eq.s32.totalorder %s29, 3
      %p241 = por %p239, %p240
      %p242 = scmp.ne.s32.totalorder %s231, %s232
      %p243 = scmp.eq.s32.totalorder %s29, 0
      %p244 = por %p242, %p243
      %p245 = scmp.ne.s32.totalorder %s231, %s232
      %p246 = scmp.eq.s32.totalorder %s30, 3
      %p247 = por %p245, %p246
      %p249 = scmp.ne.s32.totalorder %s232, %s248
      %p250 = scmp.eq.s32.totalorder %s30, 0
      %p251 = por %p249, %p250
      %s252 = ssub.s32 %s32, %s39
      %p253 = scmp.eq.s32.totalorder %s252, 0
      %s255 = sadd.s32 %s254, 1
      %s256 = scalar_select %p253, %s254, %s255
      %p259 = pneg %p253
      %p260 = scmp.eq.s32.totalorder %s24, 3
      %p261 = por %p259, %p260
      %p262 = scmp.ne.s32.totalorder %s254, %s257
      %p263 = scmp.eq.s32.totalorder %s24, 0
      %p264 = por %p262, %p263
      %p265 = scmp.ne.s32.totalorder %s254, %s257
      %p266 = scmp.eq.s32.totalorder %s29, 3
      %p267 = por %p265, %p266
      %p268 = scmp.ne.s32.totalorder %s257, %s258
      %p269 = scmp.eq.s32.totalorder %s29, 0
      %p270 = por %p268, %p269
      %p271 = scmp.ne.s32.totalorder %s257, %s258
      %p272 = scmp.eq.s32.totalorder %s30, 3
      %p273 = por %p271, %p272
      %p275 = scmp.ne.s32.totalorder %s258, %s274
      %p276 = scmp.eq.s32.totalorder %s30, 0
      %p277 = por %p275, %p276
      %s278 = ssub.s32 %s32, %s39
      %p279 = scmp.eq.s32.totalorder %s278, 0
      %s281 = sadd.s32 %s280, 1
      %s282 = scalar_select %p279, %s280, %s281
      %p285 = pneg %p279
      %p286 = scmp.eq.s32.totalorder %s24, 3
      %p287 = por %p285, %p286
      %p288 = scmp.ne.s32.totalorder %s280, %s283
      %p289 = scmp.eq.s32.totalorder %s24, 0
      %p290 = por %p288, %p289
      %p291 = scmp.ne.s32.totalorder %s280, %s283
      %p292 = scmp.eq.s32.totalorder %s29, 3
      %p293 = por %p291, %p292
      %p294 = scmp.ne.s32.totalorder %s283, %s284
      %p295 = scmp.eq.s32.totalorder %s29, 0
      %p296 = por %p294, %p295
      %p297 = scmp.ne.s32.totalorder %s283, %s284
      %p298 = scmp.eq.s32.totalorder %s30, 3
      %p299 = por %p297, %p298
      %p301 = scmp.ne.s32.totalorder %s284, %s300
      %p302 = scmp.eq.s32.totalorder %s30, 0
      %p303 = por %p301, %p302
      %s304 = ssub.s32 %s32, %s39
      %p305 = scmp.eq.s32.totalorder %s304, 0
      %s307 = sadd.s32 %s306, 1
      %s308 = scalar_select %p305, %s306, %s307
      %p311 = pneg %p305
      %p312 = scmp.eq.s32.totalorder %s24, 3
      %p313 = por %p311, %p312
      %p314 = scmp.ne.s32.totalorder %s306, %s309
      %p315 = scmp.eq.s32.totalorder %s24, 0
      %p316 = por %p314, %p315
      %p317 = scmp.ne.s32.totalorder %s306, %s309
      %p318 = scmp.eq.s32.totalorder %s29, 3
      %p319 = por %p317, %p318
      %p320 = scmp.ne.s32.totalorder %s309, %s310
      %p321 = scmp.eq.s32.totalorder %s29, 0
      %p322 = por %p320, %p321
      %p323 = scmp.ne.s32.totalorder %s309, %s310
      %p324 = scmp.eq.s32.totalorder %s30, 3
      %p325 = por %p323, %p324
      %p327 = scmp.ne.s32.totalorder %s310, %s326
      %p328 = scmp.eq.s32.totalorder %s30, 0
      %p329 = por %p327, %p328
      %s330 = ssub.s32 %s32, %s39
      %p331 = scmp.eq.s32.totalorder %s330, 0
      %s333 = sadd.s32 %s332, 1
      %s334 = scalar_select %p331, %s332, %s333
      %p337 = pneg %p331
      %p338 = scmp.eq.s32.totalorder %s24, 3
      %p339 = por %p337, %p338
      %p340 = scmp.ne.s32.totalorder %s332, %s335
      %p341 = scmp.eq.s32.totalorder %s24, 0
      %p342 = por %p340, %p341
      %p343 = scmp.ne.s32.totalorder %s332, %s335
      %p344 = scmp.eq.s32.totalorder %s29, 3
      %p345 = por %p343, %p344
      %p346 = scmp.ne.s32.totalorder %s335, %s336
      %p347 = scmp.eq.s32.totalorder %s29, 0
      %p348 = por %p346, %p347
      %p349 = scmp.ne.s32.totalorder %s335, %s336
      %p350 = scmp.eq.s32.totalorder %s30, 3
      %p351 = por %p349, %p350
      %p353 = scmp.ne.s32.totalorder %s336, %s352
      %p354 = scmp.eq.s32.totalorder %s30, 0
      %p355 = por %p353, %p354
      %s356 = ssub.s32 %s32, %s39
      %p357 = scmp.eq.s32.totalorder %s356, 0
      %s359 = sadd.s32 %s358, 1
      %s360 = scalar_select %p357, %s358, %s359
      %p363 = pneg %p357
      %p364 = scmp.eq.s32.totalorder %s24, 3
      %p365 = por %p363, %p364
      %p366 = scmp.ne.s32.totalorder %s358, %s361
      %p367 = scmp.eq.s32.totalorder %s24, 0
      %p368 = por %p366, %p367
      %p369 = scmp.ne.s32.totalorder %s358, %s361
      %p370 = scmp.eq.s32.totalorder %s29, 3
      %p371 = por %p369, %p370
      %p372 = scmp.ne.s32.totalorder %s361, %s362
      %p373 = scmp.eq.s32.totalorder %s29, 0
      %p374 = por %p372, %p373
      %p375 = scmp.ne.s32.totalorder %s361, %s362
      %p376 = scmp.eq.s32.totalorder %s30, 3
      %p377 = por %p375, %p376
      %p379 = scmp.ne.s32.totalorder %s362, %s378
      %p380 = scmp.eq.s32.totalorder %s30, 0
      %p381 = por %p379, %p380
      %s383 = sadd.s32 %s382, 1
      %p386 = scmp.eq.s32.totalorder %s24, 3
      %p387 = scmp.ne.s32.totalorder %s382, %s384
      %p388 = scmp.eq.s32.totalorder %s24, 0
      %p389 = por %p387, %p388
      %p390 = scmp.ne.s32.totalorder %s382, %s384
      %p391 = scmp.eq.s32.totalorder %s29, 3
      %p392 = por %p390, %p391
      %p393 = scmp.ne.s32.totalorder %s384, %s385
      %p394 = scmp.eq.s32.totalorder %s29, 0
      %p395 = por %p393, %p394
      %p396 = scmp.ne.s32.totalorder %s384, %s385
      %p397 = scmp.eq.s32.totalorder %s30, 3
      %p398 = por %p396, %p397
      %p400 = scmp.ne.s32.totalorder %s385, %s399
      %p401 = scmp.eq.s32.totalorder %s30, 0
      %p402 = por %p400, %p401
      %s404 = sadd.s32 %s403, 1
      %p407 = scmp.eq.s32.totalorder %s24, 3
      %p408 = scmp.ne.s32.totalorder %s403, %s405
      %p409 = scmp.eq.s32.totalorder %s24, 0
      %p410 = por %p408, %p409
      %p411 = scmp.ne.s32.totalorder %s403, %s405
      %p412 = scmp.eq.s32.totalorder %s29, 3
      %p413 = por %p411, %p412
      %p414 = scmp.ne.s32.totalorder %s405, %s406
      %p415 = scmp.eq.s32.totalorder %s29, 0
      %p416 = por %p414, %p415
      %p417 = scmp.ne.s32.totalorder %s405, %s406
      %p418 = scmp.eq.s32.totalorder %s30, 3
      %p419 = por %p417, %p418
      %p421 = scmp.ne.s32.totalorder %s406, %s420
      %p422 = scmp.eq.s32.totalorder %s30, 0
      %p423 = por %p421, %p422
      %s424 = ssub.s32 %s31, %s43
      %p425 = scmp.eq.s32.totalorder %s424, 0
      %s427 = sadd.s32 %s426, 1
      %s428 = scalar_select %p425, %s426, %s427
      %p431 = pneg %p425
      %p432 = scmp.eq.s32.totalorder %s24, 3
      %p433 = por %p431, %p432
      %p434 = scmp.ne.s32.totalorder %s426, %s429
      %p435 = scmp.eq.s32.totalorder %s24, 0
      %p436 = por %p434, %p435
      %p437 = scmp.ne.s32.totalorder %s426, %s429
      %p438 = scmp.eq.s32.totalorder %s29, 3
      %p439 = por %p437, %p438
      %p440 = scmp.ne.s32.totalorder %s429, %s430
      %p441 = scmp.eq.s32.totalorder %s29, 0
      %p442 = por %p440, %p441
      %p443 = scmp.ne.s32.totalorder %s429, %s430
      %p444 = scmp.eq.s32.totalorder %s30, 3
      %p445 = por %p443, %p444
      %p447 = scmp.ne.s32.totalorder %s430, %s446
      %p448 = scmp.eq.s32.totalorder %s30, 0
      %p449 = por %p447, %p448
      %p450 = scmp.le.s32.totalorder 1, %s24
      %p451 = scmp.lt.s32.totalorder %s24, 5
      %p452 = pnand %p450, %p451
      %p453 = pneg %p452
      // Predicated region
      $region9: #{frozen_clip_embed.1} parent=5 // pred_check
        _
      $region10: #{frozen_clip_embed.1} parent=5 // pred_check_branch
        %455 = sbr.rel (%p452) target = $region12
      $region11: #{frozen_clip_embed.1} parent=5 // pred_region
        %s456 = ssub.s32 %s24, 1
        // Predicated region
        $region13: #{frozen_clip_embed.1} parent=11 // pred_check
          %p457 = pneg %p395
        $region14: #{frozen_clip_embed.1} parent=11 // pred_check_branch
          %459 = sbr.rel (%p457) target = $region16
        $region15: #{frozen_clip_embed.1} parent=11 // pred_region
          _
        $region16: #{frozen_clip_embed.1} parent=11 // pred_fallthru
          _
        // Predicated region
        $region17: #{frozen_clip_embed.1} parent=11 // pred_check
          %p460 = pneg %p416
        $region18: #{frozen_clip_embed.1} parent=11 // pred_check_branch
          %462 = sbr.rel (%p460) target = $region20
        $region19: #{frozen_clip_embed.1} parent=11 // pred_region
          _
        $region20: #{frozen_clip_embed.1} parent=11 // pred_fallthru
          _
      $region12: #{frozen_clip_embed.1} parent=5 // pred_fallthru
        _
      %p463 = scmp.lt.s32.totalorder %s24, 4
      // Predicated region
      $region21: #{frozen_clip_embed.1} parent=5 // pred_check
        %p464 = pneg %p463
      $region22: #{frozen_clip_embed.1} parent=5 // pred_check_branch
        %466 = sbr.rel (%p464) target = $region24
      $region23: #{frozen_clip_embed.1} parent=5 // pred_region
        // Predicated region
        $region25: #{frozen_clip_embed.1} parent=23 // pred_check
          %p467 = pneg %p56
        $region26: #{frozen_clip_embed.1} parent=23 // pred_check_branch
          %469 = sbr.rel (%p467) target = $region28
        $region27: #{frozen_clip_embed.1} parent=23 // pred_region
          %p470 = scmp.lt.s32.totalorder %s31, 1
          %s471 = scalar_select %p470, %s31, 1
          %s472 = smul.addr %s471, 8
          %s473 = scalar_lea.vmem %s0, %s472
        $region28: #{frozen_clip_embed.1} parent=23 // pred_fallthru
          _
        // Predicated region
        $region29: #{frozen_clip_embed.1} parent=23 // pred_check
          %p474 = pneg %p82
        $region30: #{frozen_clip_embed.1} parent=23 // pred_check_branch
          %476 = sbr.rel (%p474) target = $region32
        $region31: #{frozen_clip_embed.1} parent=23 // pred_region
          %p477 = scmp.lt.s32.totalorder %s32, 1
          %s478 = scalar_select %p477, %s32, 1
          %s479 = scalar_lea.vmem %s1, %s478
        $region32: #{frozen_clip_embed.1} parent=23 // pred_fallthru
          _
        // Predicated region
        $region33: #{frozen_clip_embed.1} parent=23 // pred_check
          %p480 = pneg %p108
        $region34: #{frozen_clip_embed.1} parent=23 // pred_check_branch
          %482 = sbr.rel (%p480) target = $region36
        $region35: #{frozen_clip_embed.1} parent=23 // pred_region
          %p483 = scmp.lt.s32.totalorder %s32, 1
          %s484 = scalar_select %p483, %s32, 1
          %s485 = scalar_lea.vmem %s2, %s484
        $region36: #{frozen_clip_embed.1} parent=23 // pred_fallthru
          _
        // Predicated region
        $region37: #{frozen_clip_embed.1} parent=23 // pred_check
          %p486 = pneg %p134
        $region38: #{frozen_clip_embed.1} parent=23 // pred_check_branch
          %488 = sbr.rel (%p486) target = $region40
        $region39: #{frozen_clip_embed.1} parent=23 // pred_region
          %p489 = scmp.lt.s32.totalorder %s32, 1
          %s490 = scalar_select %p489, %s32, 1
          %s491 = smul.addr %s490, 4
          %s492 = smul.addr %s491, 4
          %s493 = scalar_lea.vmem %s3, %s492
        $region40: #{frozen_clip_embed.1} parent=23 // pred_fallthru
          _
        // Predicated region
        $region41: #{frozen_clip_embed.1} parent=23 // pred_check
          %p494 = pneg %p160
        $region42: #{frozen_clip_embed.1} parent=23 // pred_check_branch
          %496 = sbr.rel (%p494) target = $region44
        $region43: #{frozen_clip_embed.1} parent=23 // pred_region
          %p497 = scmp.lt.s32.totalorder %s32, 1
          %s498 = scalar_select %p497, %s32, 1
          %s499 = scalar_lea.vmem %s4, %s498
        $region44: #{frozen_clip_embed.1} parent=23 // pred_fallthru
          _
        // Predicated region
        $region45: #{frozen_clip_embed.1} parent=23 // pred_check
          %p500 = pneg %p186
        $region46: #{frozen_clip_embed.1} parent=23 // pred_check_branch
          %502 = sbr.rel (%p500) target = $region48
        $region47: #{frozen_clip_embed.1} parent=23 // pred_region
          %p503 = scmp.lt.s32.totalorder %s32, 1
          %s504 = scalar_select %p503, %s32, 1
          %s505 = smul.addr %s504, 4
          %s506 = smul.addr %s505, 4
          %s507 = scalar_lea.vmem %s5, %s506
        $region48: #{frozen_clip_embed.1} parent=23 // pred_fallthru
          _
        // Predicated region
        $region49: #{frozen_clip_embed.1} parent=23 // pred_check
          %p508 = pneg %p212
        $region50: #{frozen_clip_embed.1} parent=23 // pred_check_branch
          %510 = sbr.rel (%p508) target = $region52
        $region51: #{frozen_clip_embed.1} parent=23 // pred_region
          %p511 = scmp.lt.s32.totalorder %s32, 1
          %s512 = scalar_select %p511, %s32, 1
          %s513 = scalar_lea.vmem %s6, %s512
        $region52: #{frozen_clip_embed.1} parent=23 // pred_fallthru
          _
        // Predicated region
        $region53: #{frozen_clip_embed.1} parent=23 // pred_check
          %p514 = pneg %p238
        $region54: #{frozen_clip_embed.1} parent=23 // pred_check_branch
          %516 = sbr.rel (%p514) target = $region56
        $region55: #{frozen_clip_embed.1} parent=23 // pred_region
          %p517 = scmp.lt.s32.totalorder %s32, 1
          %s518 = scalar_select %p517, %s32, 1
          %s519 = scalar_lea.vmem %s7, %s518
        $region56: #{frozen_clip_embed.1} parent=23 // pred_fallthru
          _
        // Predicated region
        $region57: #{frozen_clip_embed.1} parent=23 // pred_check
          %p520 = pneg %p264
        $region58: #{frozen_clip_embed.1} parent=23 // pred_check_branch
          %522 = sbr.rel (%p520) target = $region60
        $region59: #{frozen_clip_embed.1} parent=23 // pred_region
          %p523 = scmp.lt.s32.totalorder %s32, 1
          %s524 = scalar_select %p523, %s32, 1
          %s525 = scalar_lea.vmem %s8, %s524
        $region60: #{frozen_clip_embed.1} parent=23 // pred_fallthru
          _
        // Predicated region
        $region61: #{frozen_clip_embed.1} parent=23 // pred_check
          %p526 = pneg %p290
        $region62: #{frozen_clip_embed.1} parent=23 // pred_check_branch
          %528 = sbr.rel (%p526) target = $region64
        $region63: #{frozen_clip_embed.1} parent=23 // pred_region
          %p529 = scmp.lt.s32.totalorder %s32, 1
          %s530 = scalar_select %p529, %s32, 1
          %s531 = smul.addr %s530, 4
          %s532 = smul.addr %s531, 4
          %s533 = scalar_lea.vmem %s9, %s532
        $region64: #{frozen_clip_embed.1} parent=23 // pred_fallthru
          _
        // Predicated region
        $region65: #{frozen_clip_embed.1} parent=23 // pred_check
          %p534 = pneg %p316
        $region66: #{frozen_clip_embed.1} parent=23 // pred_check_branch
          %536 = sbr.rel (%p534) target = $region68
        $region67: #{frozen_clip_embed.1} parent=23 // pred_region
          %p537 = scmp.lt.s32.totalorder %s32, 1
          %s538 = scalar_select %p537, %s32, 1
          %s539 = scalar_lea.vmem %s10, %s538
        $region68: #{frozen_clip_embed.1} parent=23 // pred_fallthru
          _
        // Predicated region
        $region69: #{frozen_clip_embed.1} parent=23 // pred_check
          %p540 = pneg %p342
        $region70: #{frozen_clip_embed.1} parent=23 // pred_check_branch
          %542 = sbr.rel (%p540) target = $region72
        $region71: #{frozen_clip_embed.1} parent=23 // pred_region
          %p543 = scmp.lt.s32.totalorder %s32, 1
          %s544 = scalar_select %p543, %s32, 1
          %s545 = smul.addr %s544, 16
          %s546 = smul.addr %s545, 4
          %s547 = scalar_lea.vmem %s11, %s546
        $region72: #{frozen_clip_embed.1} parent=23 // pred_fallthru
          _
        // Predicated region
        $region73: #{frozen_clip_embed.1} parent=23 // pred_check
          %p548 = pneg %p368
        $region74: #{frozen_clip_embed.1} parent=23 // pred_check_branch
          %550 = sbr.rel (%p548) target = $region76
        $region75: #{frozen_clip_embed.1} parent=23 // pred_region
          %p551 = scmp.lt.s32.totalorder %s32, 1
          %s552 = scalar_select %p551, %s32, 1
          %s553 = scalar_lea.vmem %s12, %s552
        $region76: #{frozen_clip_embed.1} parent=23 // pred_fallthru
          _
      $region24: #{frozen_clip_embed.1} parent=5 // pred_fallthru
        _
      %p554 = scmp.le.s32.totalorder 1, %s24
      %p555 = scmp.lt.s32.totalorder %s24, 5
      %p556 = pnand %p554, %p555
      %p557 = pneg %p556
      // Predicated region
      $region77: #{frozen_clip_embed.1} parent=5 // pred_check
        _
      $region78: #{frozen_clip_embed.1} parent=5 // pred_check_branch
        %559 = sbr.rel (%p556) target = $region80
      $region79: #{frozen_clip_embed.1} parent=5 // pred_region
        %s560 = ssub.s32 %s24, 1
        %p561 = scmp.lt.s32.totalorder %s33, 1
        %s562 = scalar_select %p561, %s33, 1
        %s563 = smul.addr %s562, 8
        %s564 = scalar_lea.vmem %s0, %s563
        %p565 = pneg %p62
        %p566 = pneg %p59
        %p567 = scmp.lt.s32.totalorder %s34, 1
        %s568 = scalar_select %p567, %s34, 1
        %s569 = scalar_lea.vmem %s1, %s568
        %p570 = pneg %p88
        %p571 = pneg %p85
        %p572 = scmp.lt.s32.totalorder %s34, 1
        %s573 = scalar_select %p572, %s34, 1
        %s574 = scalar_lea.vmem %s2, %s573
        %p575 = pneg %p114
        %p576 = pneg %p111
        %p577 = scmp.lt.s32.totalorder %s34, 1
        %s578 = scalar_select %p577, %s34, 1
        %s579 = smul.addr %s578, 4
        %s580 = smul.addr %s579, 4
        %s581 = scalar_lea.vmem %s3, %s580
        %p582 = pneg %p140
        %p583 = pneg %p137
        %p584 = scmp.lt.s32.totalorder %s34, 1
        %s585 = scalar_select %p584, %s34, 1
        %s586 = scalar_lea.vmem %s4, %s585
        %p587 = pneg %p166
        %p588 = pneg %p163
        %p589 = scmp.lt.s32.totalorder %s34, 1
        %s590 = scalar_select %p589, %s34, 1
        %s591 = smul.addr %s590, 4
        %s592 = smul.addr %s591, 4
        %s593 = scalar_lea.vmem %s5, %s592
        %p594 = pneg %p192
        %p595 = pneg %p189
        %p596 = scmp.lt.s32.totalorder %s34, 1
        %s597 = scalar_select %p596, %s34, 1
        %s598 = scalar_lea.vmem %s6, %s597
        %p599 = pneg %p218
        %p600 = pneg %p215
        %p601 = scmp.lt.s32.totalorder %s34, 1
        %s602 = scalar_select %p601, %s34, 1
        %s603 = scalar_lea.vmem %s7, %s602
        %p604 = pneg %p244
        %p605 = pneg %p241
        %p606 = scmp.lt.s32.totalorder %s34, 1
        %s607 = scalar_select %p606, %s34, 1
        %s608 = scalar_lea.vmem %s8, %s607
        %p609 = pneg %p270
        %p610 = pneg %p267
        %p611 = scmp.lt.s32.totalorder %s34, 1
        %s612 = scalar_select %p611, %s34, 1
        %s613 = smul.addr %s612, 4
        %s614 = smul.addr %s613, 4
        %s615 = scalar_lea.vmem %s9, %s614
        %p616 = pneg %p296
        %p617 = pneg %p293
        %p618 = scmp.lt.s32.totalorder %s34, 1
        %s619 = scalar_select %p618, %s34, 1
        %s620 = scalar_lea.vmem %s10, %s619
        %p621 = pneg %p322
        %p622 = pneg %p319
        %p623 = scmp.lt.s32.totalorder %s34, 1
        %s624 = scalar_select %p623, %s34, 1
        %s625 = smul.addr %s624, 16
        %s626 = smul.addr %s625, 4
        %s627 = scalar_lea.vmem %s11, %s626
        %p628 = pneg %p348
        %p629 = pneg %p345
        %p630 = scmp.lt.s32.totalorder %s34, 1
        %s631 = scalar_select %p630, %s34, 1
        %s632 = scalar_lea.vmem %s12, %s631
        %p633 = pneg %p374
        %p634 = pneg %p371
        %p635 = pneg %p395
        %p636 = pneg %p392
        %p637 = pneg %p416
        %p638 = pneg %p413
        %p639 = pneg %p442
        %p640 = pneg %p439
        %s641 = sand.u32 %s429, 1
        %s642 = scalar_lea.sflag [#allocation4], %s641
        %s643 = sand.u32 %s429, 1
        %s644 = smul.addr %s643, 8
        %s645 = scalar_lea.vmem [#allocation3], %s644
        %p646 = scmp.lt.s32.totalorder %s33, 1
        %s647 = scalar_select %p646, %s33, 1
        %s648 = smul.addr %s647, 8
        %s649 = scalar_lea.vmem %s0, %s648
        %p650 = scmp.lt.s32.totalorder %s34, 1
        %s651 = scalar_select %p650, %s34, 1
        %s652 = scalar_lea.vmem %s1, %s651
        %p653 = scmp.lt.s32.totalorder %s34, 1
        %s654 = scalar_select %p653, %s34, 1
        %s655 = scalar_lea.vmem %s2, %s654
        %p656 = scmp.lt.s32.totalorder %s34, 1
        %s657 = scalar_select %p656, %s34, 1
        %s658 = smul.addr %s657, 4
        %s659 = smul.addr %s658, 4
        %s660 = scalar_lea.vmem %s3, %s659
        %p661 = scmp.lt.s32.totalorder %s34, 1
        %s662 = scalar_select %p661, %s34, 1
        %s663 = scalar_lea.vmem %s4, %s662
        %p664 = scmp.lt.s32.totalorder %s34, 1
        %s665 = scalar_select %p664, %s34, 1
        %s666 = smul.addr %s665, 4
        %s667 = smul.addr %s666, 4
        %s668 = scalar_lea.vmem %s5, %s667
        %p669 = scmp.lt.s32.totalorder %s34, 1
        %s670 = scalar_select %p669, %s34, 1
        %s671 = scalar_lea.vmem %s6, %s670
        %p672 = scmp.lt.s32.totalorder %s34, 1
        %s673 = scalar_select %p672, %s34, 1
        %s674 = scalar_lea.vmem %s7, %s673
        %p675 = scmp.lt.s32.totalorder %s34, 1
        %s676 = scalar_select %p675, %s34, 1
        %s677 = scalar_lea.vmem %s8, %s676
        %p678 = scmp.lt.s32.totalorder %s34, 1
        %s679 = scalar_select %p678, %s34, 1
        %s680 = smul.addr %s679, 4
        %s681 = smul.addr %s680, 4
        %s682 = scalar_lea.vmem %s9, %s681
        %p683 = scmp.lt.s32.totalorder %s34, 1
        %s684 = scalar_select %p683, %s34, 1
        %s685 = scalar_lea.vmem %s10, %s684
        %p686 = scmp.lt.s32.totalorder %s34, 1
        %s687 = scalar_select %p686, %s34, 1
        %s688 = smul.addr %s687, 16
        %s689 = smul.addr %s688, 4
        %s690 = scalar_lea.vmem %s11, %s689
        %p691 = scmp.lt.s32.totalorder %s34, 1
        %s692 = scalar_select %p691, %s34, 1
        %s693 = scalar_lea.vmem %s12, %s692
        %p695 = scmp.eq.s32.totalorder %s34, 0
        // Predicated region
        $region81: #{frozen_clip_embed.1} parent=79 // pred_check
          %p696 = pneg %p695
        $region82: #{frozen_clip_embed.1} parent=79 // pred_check_branch
          %698 = sbr.rel (%p696) target = $region84
        $region83: #{frozen_clip_embed.1} parent=79 // pred_region
          %v699 = vld [vmem:[%s649] sm:$0xff]
          %vm700 = vcmask 261120
          %701 = vst.msk [vmem:[#allocation2] sm:$0xff] %vm700, %v699
        $region84: #{frozen_clip_embed.1} parent=79 // pred_fallthru
          _
        %v702 = vld [vmem:[#allocation2] sm:$0xff]
        %v703 = vld [vmem:[%s652] sm:$0x1]
        %v704 = vld [vmem:[%s655] sm:$0x1]
        %vm705 = vcmask 261120
        %v706 = vsel %vm705, %v702, 0.0
        %707 = vadd.xlane.f32.xlu0 %v706
        %v708 = vpop.xlane.xlu0 %707
        %v709 = vrcp.pop 32.0
        %v710 = vmul.f32 %v708, %v709
        %v711 = vsub.f32 %v702, %v710
        %v712 = vmul.f32 %v711, %v711
        %v713 = vsel %vm705, %v712, 0.0
        %714 = vadd.xlane.f32.xlu0 %v713
        %v715 = vpop.xlane.xlu0 %714
        %v716 = vmul.f32 %v715, %v709
        %v717 = vadd.f32 %v716, 1e-05
        %v718 = vrsqrt.pop %v717
        %v719 = vmul.f32 %v711, %v718
        %v721 = vlaneseq
        %v722 = vshrl.u32 %v721, 7
        %v723 = vsub.s32 0, %v722
        %v724 = vrot.slane %v703, %v723
        %v726 = vmul.f32 %v719, %v724
        %v728 = vlaneseq
        %v729 = vshrl.u32 %v728, 7
        %v730 = vsub.s32 0, %v729
        %v731 = vrot.slane %v704, %v730
        %v733 = vadd.f32 %v726, %v731
        %v734 = vpack.c.bf16 %v733, %v733
        %v735 = vld [vmem:[%s660] sm:$0xf]
        %v736 = vld [vmem:[%s660 + $0x4] sm:$0xf]
        %v737 = vld [vmem:[%s660 + $0x8] sm:$0xf]
        %v738 = vld [vmem:[%s660 + $0xc] sm:$0xf]
        %v739 = vld [vmem:[%s663] sm:$0x1]
        %v741 = vlaneseq
        %v742 = vshrl.u32 %v741, 7
        %v743 = vsub.s32 0, %v742
        %v744 = vrot.slane %v739, %v743
        %v750 = vunpack.c.l.b16 %v735
        %v751 = vunpack.c.l.b16 %v736
        %v752 = vunpack.c.l.b16 %v737
        %v753 = vunpack.c.l.b16 %v738
        %v754 = vpack.c.b16 %v751, %v750
        %v755 = vpack.c.b16 %v753, %v752
        %v759 = vsel %vm705, %v734, 0
        %761 = vmatprep.subr.bf16.mxu0 0
        %762 = vmatpush1.bf16.msra.mxu0 %v754
        %763 = vmatprep.subr.bf16.mxu0 0
        %764 = vmatpush1.bf16.msra.mxu0 %v755
        %765 = vmatprep.subr.bf16.mxu0 0
        %766 = vmatpush1.bf16.msra.mxu0 0
        %767 = vmatprep.subr.bf16.mxu0 0
        %768 = vmatpush1.bf16.msra.mxu0 0
        %769 = vmatprep.subr.bf16.mxu0 0
        %770 = vmatpush1.bf16.msra.mxu0 0
        %771 = vmatprep.subr.bf16.mxu0 0
        %772 = vmatpush1.bf16.msra.mxu0 0
        %773 = vmatprep.subr.bf16.mxu0 0
        %774 = vmatpush1.bf16.msra.mxu0 0
        %775 = vmatprep.subr.bf16.mxu0 0
        %776 = vmatpush1.bf16.msra.mxu0 0
        %777 = vmatprep.subr.bf16.mxu0 0
        %778 = vmatpush1.bf16.msra.mxu0 0
        %779 = vmatprep.subr.bf16.mxu0 0
        %780 = vmatpush1.bf16.msra.mxu0 0
        %781 = vmatprep.subr.bf16.mxu0 0
        %782 = vmatpush1.bf16.msra.mxu0 0
        %783 = vmatprep.subr.bf16.mxu0 0
        %784 = vmatpush1.bf16.msra.mxu0 0
        %785 = vmatprep.subr.bf16.mxu0 0
        %786 = vmatpush1.bf16.msra.mxu0 0
        %787 = vmatprep.subr.bf16.mxu0 0
        %788 = vmatpush1.bf16.msra.mxu0 0
        %789 = vmatprep.subr.bf16.mxu0 0
        %790 = vmatpush1.bf16.msra.mxu0 0
        %791 = vmatprep.subr.bf16.mxu0 0
        %792 = vmatpush1.bf16.msra.mxu0 0
        %793 = vmatprep.mubr.bf16.mxu0 0
        %794 = vmatmul.mubr.bf16.gmra.mrb[0].mxu0 %v759
        %v795 = vpop.f32.mrb[0].mxu0
        %v796 = vadd.f32 %v744, %v795
        %v797 = vpop.f32.mrb[0].mxu0
        %v798 = vpop.f32.mrb[0].mxu0
        %v799 = vpop.f32.mrb[0].mxu0
        %800 = vdwg.mxu0
        %v801 = vlaneseq
        %v802 = vshrl.u32 %v801, 7
        %v803 = vlaneseq
        %v804 = vand.u32 %v803, 127
        %vm805 = vcmp.le.s32.totalorder %v804, %v802
        %v806 = vpack.c.bf16 %v796, %v796
        %808 = vrot.lane.b32.xlu0 %v806, 96
        %v809 = vpop.permute.xlu0 %808
        %vm810 = vcmask 64512
        %v812 = vsel %vm810, %v806, 0
        %v815 = vsel %vm810, %v809, 0
        %817 = vmatprep.subr.bf16.mxu0 0
        %818 = vmatpush1.bf16.xpose.msra.mxu0 %v815
        %819 = vmatprep.subr.bf16.mxu0 0
        %820 = vmatpush1.bf16.xpose.msra.mxu0 0
        %821 = vmatprep.subr.bf16.mxu0 0
        %822 = vmatpush1.bf16.xpose.msra.mxu0 0
        %823 = vmatprep.subr.bf16.mxu0 0
        %824 = vmatpush1.bf16.xpose.msra.mxu0 0
        %825 = vmatprep.subr.bf16.mxu0 0
        %826 = vmatpush1.bf16.xpose.msra.mxu0 0
        %827 = vmatprep.subr.bf16.mxu0 0
        %828 = vmatpush1.bf16.xpose.msra.mxu0 0
        %829 = vmatprep.subr.bf16.mxu0 0
        %830 = vmatpush1.bf16.xpose.msra.mxu0 0
        %831 = vmatprep.subr.bf16.mxu0 0
        %832 = vmatpush1.bf16.xpose.msra.mxu0 0
        %833 = vmatprep.subr.bf16.mxu0 0
        %834 = vmatpush1.bf16.xpose.msra.mxu0 0
        %835 = vmatprep.subr.bf16.mxu0 0
        %836 = vmatpush1.bf16.xpose.msra.mxu0 0
        %837 = vmatprep.subr.bf16.mxu0 0
        %838 = vmatpush1.bf16.xpose.msra.mxu0 0
        %839 = vmatprep.subr.bf16.mxu0 0
        %840 = vmatpush1.bf16.xpose.msra.mxu0 0
        %841 = vmatprep.subr.bf16.mxu0 0
        %842 = vmatpush1.bf16.xpose.msra.mxu0 0
        %843 = vmatprep.subr.bf16.mxu0 0
        %844 = vmatpush1.bf16.xpose.msra.mxu0 0
        %845 = vmatprep.subr.bf16.mxu0 0
        %846 = vmatpush1.bf16.xpose.msra.mxu0 0
        %847 = vmatprep.subr.bf16.mxu0 0
        %848 = vmatpush1.bf16.xpose.msra.mxu0 0
        %849 = vmatprep.mubr.bf16.mxu0 0
        %850 = vmatmul.mubr.bf16.gmra.mrb[0].mxu0 %v812
        %v851 = vpop.f32.mrb[0].mxu0
        %v852 = vadd.f32 0.0, %v851
        %v853 = vpop.f32.mrb[0].mxu0
        %v854 = vpop.f32.mrb[0].mxu0
        %v855 = vpop.f32.mrb[0].mxu0
        %856 = vdwg.mxu0
        %v857 = vsel %vm805, %v852, -1e+30
        %v858 = vsel %vm810, %v857, -inf
        %859 = vmax.xlane.f32.xlu0 %v858
        %v860 = vpop.xlane.xlu0 %859
        %v861 = vsub.f32 %v857, %v860
        %v862 = vmul.f32 %v861, 1.442695
        %v863 = vpow.pop %v862
        %v864 = vsel %vm810, %v863, 0.0
        %865 = vadd.xlane.f32.xlu0 %v864
        %v866 = vpop.xlane.xlu0 %865
        %v867 = vrcp.pop %v866
        %v868 = vmul.f32 %v863, %v867
        %v869 = vpack.c.bf16 %v868, %v868
        %870 = vrot.lane.b32.xlu0 %v806, 64
        %v871 = vpop.permute.xlu0 %870
        %v873 = vsel %vm810, %v869, 0
        %vm875 = vcmask 1043456
        %v877 = vsel %vm875, %v871, 0
        %879 = vmatprep.subr.bf16.mxu0 0
        %880 = vmatpush1.bf16.msra.mxu0 %v877
        %881 = vmatprep.subr.bf16.mxu0 0
        %882 = vmatpush1.bf16.msra.mxu0 0
        %883 = vmatprep.subr.bf16.mxu0 0
        %884 = vmatpush1.bf16.msra.mxu0 0
        %885 = vmatprep.subr.bf16.mxu0 0
        %886 = vmatpush1.bf16.msra.mxu0 0
        %887 = vmatprep.subr.bf16.mxu0 0
        %888 = vmatpush1.bf16.msra.mxu0 0
        %889 = vmatprep.subr.bf16.mxu0 0
        %890 = vmatpush1.bf16.msra.mxu0 0
        %891 = vmatprep.subr.bf16.mxu0 0
        %892 = vmatpush1.bf16.msra.mxu0 0
        %893 = vmatprep.subr.bf16.mxu0 0
        %894 = vmatpush1.bf16.msra.mxu0 0
        %895 = vmatprep.subr.bf16.mxu0 0
        %896 = vmatpush1.bf16.msra.mxu0 0
        %897 = vmatprep.subr.bf16.mxu0 0
        %898 = vmatpush1.bf16.msra.mxu0 0
        %899 = vmatprep.subr.bf16.mxu0 0
        %900 = vmatpush1.bf16.msra.mxu0 0
        %901 = vmatprep.subr.bf16.mxu0 0
        %902 = vmatpush1.bf16.msra.mxu0 0
        %903 = vmatprep.subr.bf16.mxu0 0
        %904 = vmatpush1.bf16.msra.mxu0 0
        %905 = vmatprep.subr.bf16.mxu0 0
        %906 = vmatpush1.bf16.msra.mxu0 0
        %907 = vmatprep.subr.bf16.mxu0 0
        %908 = vmatpush1.bf16.msra.mxu0 0
        %909 = vmatprep.subr.bf16.mxu0 0
        %910 = vmatpush1.bf16.msra.mxu0 0
        %911 = vmatprep.mubr.bf16.mxu0 0
        %912 = vmatmul.mubr.bf16.gmra.mrb[0].mxu0 %v873
        %v913 = vpop.f32.mrb[0].mxu0
        %v914 = vadd.f32 0.0, %v913
        %v915 = vpop.f32.mrb[0].mxu0
        %v916 = vpop.f32.mrb[0].mxu0
        %v917 = vpop.f32.mrb[0].mxu0
        %918 = vdwg.mxu0
        %919 = vrot.lane.b32.xlu0 %v806, 120
        %v920 = vpop.permute.xlu0 %919
        %921 = vrot.lane.b32.xlu0 %v806, 88
        %v922 = vpop.permute.xlu0 %921
        %v924 = vsel %vm810, %v920, 0
        %v927 = vsel %vm810, %v922, 0
        %929 = vmatprep.subr.bf16.mxu0 0
        %930 = vmatpush1.bf16.xpose.msra.mxu0 %v927
        %931 = vmatprep.subr.bf16.mxu0 0
        %932 = vmatpush1.bf16.xpose.msra.mxu0 0
        %933 = vmatprep.subr.bf16.mxu0 0
        %934 = vmatpush1.bf16.xpose.msra.mxu0 0
        %935 = vmatprep.subr.bf16.mxu0 0
        %936 = vmatpush1.bf16.xpose.msra.mxu0 0
        %937 = vmatprep.subr.bf16.mxu0 0
        %938 = vmatpush1.bf16.xpose.msra.mxu0 0
        %939 = vmatprep.subr.bf16.mxu0 0
        %940 = vmatpush1.bf16.xpose.msra.mxu0 0
        %941 = vmatprep.subr.bf16.mxu0 0
        %942 = vmatpush1.bf16.xpose.msra.mxu0 0
        %943 = vmatprep.subr.bf16.mxu0 0
        %944 = vmatpush1.bf16.xpose.msra.mxu0 0
        %945 = vmatprep.subr.bf16.mxu0 0
        %946 = vmatpush1.bf16.xpose.msra.mxu0 0
        %947 = vmatprep.subr.bf16.mxu0 0
        %948 = vmatpush1.bf16.xpose.msra.mxu0 0
        %949 = vmatprep.subr.bf16.mxu0 0
        %950 = vmatpush1.bf16.xpose.msra.mxu0 0
        %951 = vmatprep.subr.bf16.mxu0 0
        %952 = vmatpush1.bf16.xpose.msra.mxu0 0
        %953 = vmatprep.subr.bf16.mxu0 0
        %954 = vmatpush1.bf16.xpose.msra.mxu0 0
        %955 = vmatprep.subr.bf16.mxu0 0
        %956 = vmatpush1.bf16.xpose.msra.mxu0 0
        %957 = vmatprep.subr.bf16.mxu0 0
        %958 = vmatpush1.bf16.xpose.msra.mxu0 0
        %959 = vmatprep.subr.bf16.mxu0 0
        %960 = vmatpush1.bf16.xpose.msra.mxu0 0
        %961 = vmatprep.mubr.bf16.mxu0 0
        %962 = vmatmul.mubr.bf16.gmra.mrb[0].mxu0 %v924
        %v963 = vpop.f32.mrb[0].mxu0
        %v964 = vadd.f32 0.0, %v963
        %v965 = vpop.f32.mrb[0].mxu0
        %v966 = vpop.f32.mrb[0].mxu0
        %v967 = vpop.f32.mrb[0].mxu0
        %968 = vdwg.mxu0
        %v969 = vsel %vm805, %v964, -1e+30
        %v970 = vsel %vm810, %v969, -inf
        %971 = vmax.xlane.f32.xlu0 %v970
        %v972 = vpop.xlane.xlu0 %971
        %v973 = vsub.f32 %v969, %v972
        %v974 = vmul.f32 %v973, 1.442695
        %v975 = vpow.pop %v974
        %v976 = vsel %vm810, %v975, 0.0
        %977 = vadd.xlane.f32.xlu0 %v976
        %v978 = vpop.xlane.xlu0 %977
        %v979 = vrcp.pop %v978
        %v980 = vmul.f32 %v975, %v979
        %v981 = vpack.c.bf16 %v980, %v980
        %982 = vrot.lane.b32.xlu0 %v806, 56
        %v983 = vpop.permute.xlu0 %982
        %v985 = vsel %vm810, %v981, 0
        %v988 = vsel %vm875, %v983, 0
        %990 = vmatprep.subr.bf16.mxu0 0
        %991 = vmatpush1.bf16.msra.mxu0 %v988
        %992 = vmatprep.subr.bf16.mxu0 0
        %993 = vmatpush1.bf16.msra.mxu0 0
        %994 = vmatprep.subr.bf16.mxu0 0
        %995 = vmatpush1.bf16.msra.mxu0 0
        %996 = vmatprep.subr.bf16.mxu0 0
        %997 = vmatpush1.bf16.msra.mxu0 0
        %998 = vmatprep.subr.bf16.mxu0 0
        %999 = vmatpush1.bf16.msra.mxu0 0
        %1000 = vmatprep.subr.bf16.mxu0 0
        %1001 = vmatpush1.bf16.msra.mxu0 0
        %1002 = vmatprep.subr.bf16.mxu0 0
        %1003 = vmatpush1.bf16.msra.mxu0 0
        %1004 = vmatprep.subr.bf16.mxu0 0
        %1005 = vmatpush1.bf16.msra.mxu0 0
        %1006 = vmatprep.subr.bf16.mxu0 0
        %1007 = vmatpush1.bf16.msra.mxu0 0
        %1008 = vmatprep.subr.bf16.mxu0 0
        %1009 = vmatpush1.bf16.msra.mxu0 0
        %1010 = vmatprep.subr.bf16.mxu0 0
        %1011 = vmatpush1.bf16.msra.mxu0 0
        %1012 = vmatprep.subr.bf16.mxu0 0
        %1013 = vmatpush1.bf16.msra.mxu0 0
        %1014 = vmatprep.subr.bf16.mxu0 0
        %1015 = vmatpush1.bf16.msra.mxu0 0
        %1016 = vmatprep.subr.bf16.mxu0 0
        %1017 = vmatpush1.bf16.msra.mxu0 0
        %1018 = vmatprep.subr.bf16.mxu0 0
        %1019 = vmatpush1.bf16.msra.mxu0 0
        %1020 = vmatprep.subr.bf16.mxu0 0
        %1021 = vmatpush1.bf16.msra.mxu0 0
        %1022 = vmatprep.mubr.bf16.mxu0 0
        %1023 = vmatmul.mubr.bf16.gmra.mrb[0].mxu0 %v985
        %v1024 = vpop.f32.mrb[0].mxu0
        %v1025 = vadd.f32 0.0, %v1024
        %v1026 = vpop.f32.mrb[0].mxu0
        %v1027 = vpop.f32.mrb[0].mxu0
        %v1028 = vpop.f32.mrb[0].mxu0
        %1029 = vdwg.mxu0
        %1030 = vrot.lane.b32.xlu0 %v806, 112
        %v1031 = vpop.permute.xlu0 %1030
        %1032 = vrot.lane.b32.xlu0 %v806, 80
        %v1033 = vpop.permute.xlu0 %1032
        %v1035 = vsel %vm810, %v1031, 0
        %v1038 = vsel %vm810, %v1033, 0
        %1040 = vmatprep.subr.bf16.mxu0 0
        %1041 = vmatpush1.bf16.xpose.msra.mxu0 %v1038
        %1042 = vmatprep.subr.bf16.mxu0 0
        %1043 = vmatpush1.bf16.xpose.msra.mxu0 0
        %1044 = vmatprep.subr.bf16.mxu0 0
        %1045 = vmatpush1.bf16.xpose.msra.mxu0 0
        %1046 = vmatprep.subr.bf16.mxu0 0
        %1047 = vmatpush1.bf16.xpose.msra.mxu0 0
        %1048 = vmatprep.subr.bf16.mxu0 0
        %1049 = vmatpush1.bf16.xpose.msra.mxu0 0
        %1050 = vmatprep.subr.bf16.mxu0 0
        %1051 = vmatpush1.bf16.xpose.msra.mxu0 0
        %1052 = vmatprep.subr.bf16.mxu0 0
        %1053 = vmatpush1.bf16.xpose.msra.mxu0 0
        %1054 = vmatprep.subr.bf16.mxu0 0
        %1055 = vmatpush1.bf16.xpose.msra.mxu0 0
        %1056 = vmatprep.subr.bf16.mxu0 0
        %1057 = vmatpush1.bf16.xpose.msra.mxu0 0
        %1058 = vmatprep.subr.bf16.mxu0 0
        %1059 = vmatpush1.bf16.xpose.msra.mxu0 0
        %1060 = vmatprep.subr.bf16.mxu0 0
        %1061 = vmatpush1.bf16.xpose.msra.mxu0 0
        %1062 = vmatprep.subr.bf16.mxu0 0
        %1063 = vmatpush1.bf16.xpose.msra.mxu0 0
        %1064 = vmatprep.subr.bf16.mxu0 0
        %1065 = vmatpush1.bf16.xpose.msra.mxu0 0
        %1066 = vmatprep.subr.bf16.mxu0 0
        %1067 = vmatpush1.bf16.xpose.msra.mxu0 0
        %1068 = vmatprep.subr.bf16.mxu0 0
        %1069 = vmatpush1.bf16.xpose.msra.mxu0 0
        %1070 = vmatprep.subr.bf16.mxu0 0
        %1071 = vmatpush1.bf16.xpose.msra.mxu0 0
        %1072 = vmatprep.mubr.bf16.mxu0 0
        %1073 = vmatmul.mubr.bf16.gmra.mrb[0].mxu0 %v1035
        %v1074 = vpop.f32.mrb[0].mxu0
        %v1075 = vadd.f32 0.0, %v1074
        %v1076 = vpop.f32.mrb[0].mxu0
        %v1077 = vpop.f32.mrb[0].mxu0
        %v1078 = vpop.f32.mrb[0].mxu0
        %1079 = vdwg.mxu0
        %v1080 = vsel %vm805, %v1075, -1e+30
        %v1081 = vsel %vm810, %v1080, -inf
        %1082 = vmax.xlane.f32.xlu0 %v1081
        %v1083 = vpop.xlane.xlu0 %1082
        %v1084 = vsub.f32 %v1080, %v1083
        %v1085 = vmul.f32 %v1084, 1.442695
        %v1086 = vpow.pop %v1085
        %v1087 = vsel %vm810, %v1086, 0.0
        %1088 = vadd.xlane.f32.xlu0 %v1087
        %v1089 = vpop.xlane.xlu0 %1088
        %v1090 = vrcp.pop %v1089
        %v1091 = vmul.f32 %v1086, %v1090
        %v1092 = vpack.c.bf16 %v1091, %v1091
        %1093 = vrot.lane.b32.xlu0 %v806, 48
        %v1094 = vpop.permute.xlu0 %1093
        %v1096 = vsel %vm810, %v1092, 0
        %v1099 = vsel %vm875, %v1094, 0
        %1101 = vmatprep.subr.bf16.mxu0 0
        %1102 = vmatpush1.bf16.msra.mxu0 %v1099
        %1103 = vmatprep.subr.bf16.mxu0 0
        %1104 = vmatpush1.bf16.msra.mxu0 0
        %1105 = vmatprep.subr.bf16.mxu0 0
        %1106 = vmatpush1.bf16.msra.mxu0 0
        %1107 = vmatprep.subr.bf16.mxu0 0
        %1108 = vmatpush1.bf16.msra.mxu0 0
        %1109 = vmatprep.subr.bf16.mxu0 0
        %1110 = vmatpush1.bf16.msra.mxu0 0
        %1111 = vmatprep.subr.bf16.mxu0 0
        %1112 = vmatpush1.bf16.msra.mxu0 0
        %1113 = vmatprep.subr.bf16.mxu0 0
        %1114 = vmatpush1.bf16.msra.mxu0 0
        %1115 = vmatprep.subr.bf16.mxu0 0
        %1116 = vmatpush1.bf16.msra.mxu0 0
        %1117 = vmatprep.subr.bf16.mxu0 0
        %1118 = vmatpush1.bf16.msra.mxu0 0
        %1119 = vmatprep.subr.bf16.mxu0 0
        %1120 = vmatpush1.bf16.msra.mxu0 0
        %1121 = vmatprep.subr.bf16.mxu0 0
        %1122 = vmatpush1.bf16.msra.mxu0 0
        %1123 = vmatprep.subr.bf16.mxu0 0
        %1124 = vmatpush1.bf16.msra.mxu0 0
        %1125 = vmatprep.subr.bf16.mxu0 0
        %1126 = vmatpush1.bf16.msra.mxu0 0
        %1127 = vmatprep.subr.bf16.mxu0 0
        %1128 = vmatpush1.bf16.msra.mxu0 0
        %1129 = vmatprep.subr.bf16.mxu0 0
        %1130 = vmatpush1.bf16.msra.mxu0 0
        %1131 = vmatprep.subr.bf16.mxu0 0
        %1132 = vmatpush1.bf16.msra.mxu0 0
        %1133 = vmatprep.mubr.bf16.mxu0 0
        %1134 = vmatmul.mubr.bf16.gmra.mrb[0].mxu0 %v1096
        %v1135 = vpop.f32.mrb[0].mxu0
        %v1136 = vadd.f32 0.0, %v1135
        %v1137 = vpop.f32.mrb[0].mxu0
        %v1138 = vpop.f32.mrb[0].mxu0
        %v1139 = vpop.f32.mrb[0].mxu0
        %1140 = vdwg.mxu0
        %1141 = vrot.lane.b32.xlu0 %v806, 104
        %v1142 = vpop.permute.xlu0 %1141
        %1143 = vrot.lane.b32.xlu0 %v806, 72
        %v1144 = vpop.permute.xlu0 %1143
        %v1146 = vsel %vm810, %v1142, 0
        %v1149 = vsel %vm810, %v1144, 0
        %1151 = vmatprep.subr.bf16.mxu0 0
        %1152 = vmatpush1.bf16.xpose.msra.mxu0 %v1149
        %1153 = vmatprep.subr.bf16.mxu0 0
        %1154 = vmatpush1.bf16.xpose.msra.mxu0 0
        %1155 = vmatprep.subr.bf16.mxu0 0
        %1156 = vmatpush1.bf16.xpose.msra.mxu0 0
        %1157 = vmatprep.subr.bf16.mxu0 0
        %1158 = vmatpush1.bf16.xpose.msra.mxu0 0
        %1159 = vmatprep.subr.bf16.mxu0 0
        %1160 = vmatpush1.bf16.xpose.msra.mxu0 0
        %1161 = vmatprep.subr.bf16.mxu0 0
        %1162 = vmatpush1.bf16.xpose.msra.mxu0 0
        %1163 = vmatprep.subr.bf16.mxu0 0
        %1164 = vmatpush1.bf16.xpose.msra.mxu0 0
        %1165 = vmatprep.subr.bf16.mxu0 0
        %1166 = vmatpush1.bf16.xpose.msra.mxu0 0
        %1167 = vmatprep.subr.bf16.mxu0 0
        %1168 = vmatpush1.bf16.xpose.msra.mxu0 0
        %1169 = vmatprep.subr.bf16.mxu0 0
        %1170 = vmatpush1.bf16.xpose.msra.mxu0 0
        %1171 = vmatprep.subr.bf16.mxu0 0
        %1172 = vmatpush1.bf16.xpose.msra.mxu0 0
        %1173 = vmatprep.subr.bf16.mxu0 0
        %1174 = vmatpush1.bf16.xpose.msra.mxu0 0
        %1175 = vmatprep.subr.bf16.mxu0 0
        %1176 = vmatpush1.bf16.xpose.msra.mxu0 0
        %1177 = vmatprep.subr.bf16.mxu0 0
        %1178 = vmatpush1.bf16.xpose.msra.mxu0 0
        %1179 = vmatprep.subr.bf16.mxu0 0
        %1180 = vmatpush1.bf16.xpose.msra.mxu0 0
        %1181 = vmatprep.subr.bf16.mxu0 0
        %1182 = vmatpush1.bf16.xpose.msra.mxu0 0
        %1183 = vmatprep.mubr.bf16.mxu0 0
        %1184 = vmatmul.mubr.bf16.gmra.mrb[0].mxu0 %v1146
        %v1185 = vpop.f32.mrb[0].mxu0
        %v1186 = vadd.f32 0.0, %v1185
        %v1187 = vpop.f32.mrb[0].mxu0
        %v1188 = vpop.f32.mrb[0].mxu0
        %v1189 = vpop.f32.mrb[0].mxu0
        %1190 = vdwg.mxu0
        %v1191 = vsel %vm805, %v1186, -1e+30
        %v1192 = vsel %vm810, %v1191, -inf
        %1193 = vmax.xlane.f32.xlu0 %v1192
        %v1194 = vpop.xlane.xlu0 %1193
        %v1195 = vsub.f32 %v1191, %v1194
        %v1196 = vmul.f32 %v1195, 1.442695
        %v1197 = vpow.pop %v1196
        %v1198 = vsel %vm810, %v1197, 0.0
        %1199 = vadd.xlane.f32.xlu0 %v1198
        %v1200 = vpop.xlane.xlu0 %1199
        %v1201 = vrcp.pop %v1200
        %v1202 = vmul.f32 %v1197, %v1201
        %v1203 = vpack.c.bf16 %v1202, %v1202
        %1204 = vrot.lane.b32.xlu0 %v806, 40
        %v1205 = vpop.permute.xlu0 %1204
        %v1207 = vsel %vm810, %v1203, 0
        %v1210 = vsel %vm875, %v1205, 0
        %1212 = vmatprep.subr.bf16.mxu0 0
        %1213 = vmatpush1.bf16.msra.mxu0 %v1210
        %1214 = vmatprep.subr.bf16.mxu0 0
        %1215 = vmatpush1.bf16.msra.mxu0 0
        %1216 = vmatprep.subr.bf16.mxu0 0
        %1217 = vmatpush1.bf16.msra.mxu0 0
        %1218 = vmatprep.subr.bf16.mxu0 0
        %1219 = vmatpush1.bf16.msra.mxu0 0
        %1220 = vmatprep.subr.bf16.mxu0 0
        %1221 = vmatpush1.bf16.msra.mxu0 0
        %1222 = vmatprep.subr.bf16.mxu0 0
        %1223 = vmatpush1.bf16.msra.mxu0 0
        %1224 = vmatprep.subr.bf16.mxu0 0
        %1225 = vmatpush1.bf16.msra.mxu0 0
        %1226 = vmatprep.subr.bf16.mxu0 0
        %1227 = vmatpush1.bf16.msra.mxu0 0
        %1228 = vmatprep.subr.bf16.mxu0 0
        %1229 = vmatpush1.bf16.msra.mxu0 0
        %1230 = vmatprep.subr.bf16.mxu0 0
        %1231 = vmatpush1.bf16.msra.mxu0 0
        %1232 = vmatprep.subr.bf16.mxu0 0
        %1233 = vmatpush1.bf16.msra.mxu0 0
        %1234 = vmatprep.subr.bf16.mxu0 0
        %1235 = vmatpush1.bf16.msra.mxu0 0
        %1236 = vmatprep.subr.bf16.mxu0 0
        %1237 = vmatpush1.bf16.msra.mxu0 0
        %1238 = vmatprep.subr.bf16.mxu0 0
        %1239 = vmatpush1.bf16.msra.mxu0 0
        %1240 = vmatprep.subr.bf16.mxu0 0
        %1241 = vmatpush1.bf16.msra.mxu0 0
        %1242 = vmatprep.subr.bf16.mxu0 0
        %1243 = vmatpush1.bf16.msra.mxu0 0
        %1244 = vmatprep.mubr.bf16.mxu0 0
        %1245 = vmatmul.mubr.bf16.gmra.mrb[0].mxu0 %v1207
        %v1246 = vpop.f32.mrb[0].mxu0
        %v1247 = vadd.f32 0.0, %v1246
        %v1248 = vpop.f32.mrb[0].mxu0
        %v1249 = vpop.f32.mrb[0].mxu0
        %v1250 = vpop.f32.mrb[0].mxu0
        %1251 = vdwg.mxu0
        %1253 = vrot.lane.b32.xlu0 %v1025, 8
        %v1254 = vpop.permute.xlu0 %1253
        %1257 = vrot.lane.b32.xlu0 %v1136, 16
        %v1258 = vpop.permute.xlu0 %1257
        %1261 = vrot.lane.b32.xlu0 %v1247, 24
        %v1262 = vpop.permute.xlu0 %1261
        %v1264 = vsel %vm810, %v914, %v1254
        %vm1265 = vcmask 130048
        %v1266 = vsel %vm1265, %v1264, %v1258
        %vm1267 = vcmask 195584
        %v1268 = vsel %vm1267, %v1266, %v1262
        %v1269 = vpack.c.bf16 %v1268, %v1268
        %v1270 = vld [vmem:[%s668] sm:$0xf]
        %v1271 = vld [vmem:[%s668 + $0x4] sm:$0xf]
        %v1272 = vld [vmem:[%s668 + $0x8] sm:$0xf]
        %v1273 = vld [vmem:[%s668 + $0xc] sm:$0xf]
        %v1274 = vld [vmem:[%s671] sm:$0x1]
        %v1276 = vlaneseq
        %v1277 = vshrl.u32 %v1276, 7
        %v1278 = vsub.s32 0, %v1277
        %v1279 = vrot.slane %v1274, %v1278
        %v1285 = vunpack.c.l.b16 %v1270
        %v1286 = vunpack.c.l.b16 %v1271
        %v1287 = vunpack.c.l.b16 %v1272
        %v1288 = vunpack.c.l.b16 %v1273
        %v1289 = vpack.c.b16 %v1286, %v1285
        %v1290 = vpack.c.b16 %v1288, %v1287
        %v1294 = vsel %vm705, %v1269, 0
        %1296 = vmatprep.subr.bf16.mxu0 0
        %1297 = vmatpush1.bf16.msra.mxu0 %v1289
        %1298 = vmatprep.subr.bf16.mxu0 0
        %1299 = vmatpush1.bf16.msra.mxu0 %v1290
        %1300 = vmatprep.subr.bf16.mxu0 0
        %1301 = vmatpush1.bf16.msra.mxu0 0
        %1302 = vmatprep.subr.bf16.mxu0 0
        %1303 = vmatpush1.bf16.msra.mxu0 0
        %1304 = vmatprep.subr.bf16.mxu0 0
        %1305 = vmatpush1.bf16.msra.mxu0 0
        %1306 = vmatprep.subr.bf16.mxu0 0
        %1307 = vmatpush1.bf16.msra.mxu0 0
        %1308 = vmatprep.subr.bf16.mxu0 0
        %1309 = vmatpush1.bf16.msra.mxu0 0
        %1310 = vmatprep.subr.bf16.mxu0 0
        %1311 = vmatpush1.bf16.msra.mxu0 0
        %1312 = vmatprep.subr.bf16.mxu0 0
        %1313 = vmatpush1.bf16.msra.mxu0 0
        %1314 = vmatprep.subr.bf16.mxu0 0
        %1315 = vmatpush1.bf16.msra.mxu0 0
        %1316 = vmatprep.subr.bf16.mxu0 0
        %1317 = vmatpush1.bf16.msra.mxu0 0
        %1318 = vmatprep.subr.bf16.mxu0 0
        %1319 = vmatpush1.bf16.msra.mxu0 0
        %1320 = vmatprep.subr.bf16.mxu0 0
        %1321 = vmatpush1.bf16.msra.mxu0 0
        %1322 = vmatprep.subr.bf16.mxu0 0
        %1323 = vmatpush1.bf16.msra.mxu0 0
        %1324 = vmatprep.subr.bf16.mxu0 0
        %1325 = vmatpush1.bf16.msra.mxu0 0
        %1326 = vmatprep.subr.bf16.mxu0 0
        %1327 = vmatpush1.bf16.msra.mxu0 0
        %1328 = vmatprep.mubr.bf16.mxu0 0
        %1329 = vmatmul.mubr.bf16.gmra.mrb[0].mxu0 %v1294
        %v1330 = vpop.f32.mrb[0].mxu0
        %v1331 = vadd.f32 %v1279, %v1330
        %v1332 = vpop.f32.mrb[0].mxu0
        %v1333 = vpop.f32.mrb[0].mxu0
        %v1334 = vpop.f32.mrb[0].mxu0
        %1335 = vdwg.mxu0
        %v1336 = vadd.f32 %v702, %v1331
        %v1337 = vld [vmem:[%s674] sm:$0x1]
        %v1338 = vld [vmem:[%s677] sm:$0x1]
        %v1339 = vsel %vm705, %v1336, 0.0
        %1340 = vadd.xlane.f32.xlu0 %v1339
        %v1341 = vpop.xlane.xlu0 %1340
        %v1342 = vmul.f32 %v1341, %v709
        %v1343 = vsub.f32 %v1336, %v1342
        %v1344 = vmul.f32 %v1343, %v1343
        %v1345 = vsel %vm705, %v1344, 0.0
        %1346 = vadd.xlane.f32.xlu0 %v1345
        %v1347 = vpop.xlane.xlu0 %1346
        %v1348 = vmul.f32 %v1347, %v709
        %v1349 = vadd.f32 %v1348, 1e-05
        %v1350 = vrsqrt.pop %v1349
        %v1351 = vmul.f32 %v1343, %v1350
        %v1353 = vlaneseq
        %v1354 = vshrl.u32 %v1353, 7
        %v1355 = vsub.s32 0, %v1354
        %v1356 = vrot.slane %v1337, %v1355
        %v1358 = vmul.f32 %v1351, %v1356
        %v1360 = vlaneseq
        %v1361 = vshrl.u32 %v1360, 7
        %v1362 = vsub.s32 0, %v1361
        %v1363 = vrot.slane %v1338, %v1362
        %v1365 = vadd.f32 %v1358, %v1363
        %v1366 = vpack.c.bf16 %v1365, %v1365
        %v1367 = vld [vmem:[%s682] sm:$0xf]
        %v1368 = vld [vmem:[%s682 + $0x4] sm:$0xf]
        %v1369 = vld [vmem:[%s682 + $0x8] sm:$0xf]
        %v1370 = vld [vmem:[%s682 + $0xc] sm:$0xf]
        %v1371 = vld [vmem:[%s685] sm:$0x1]
        %v1373 = vlaneseq
        %v1374 = vshrl.u32 %v1373, 7
        %v1375 = vsub.s32 0, %v1374
        %v1376 = vrot.slane %v1371, %v1375
        %v1382 = vunpack.c.l.b16 %v1367
        %v1383 = vunpack.c.l.b16 %v1368
        %v1384 = vunpack.c.l.b16 %v1369
        %v1385 = vunpack.c.l.b16 %v1370
        %v1386 = vpack.c.b16 %v1383, %v1382
        %v1387 = vpack.c.b16 %v1385, %v1384
        %v1391 = vsel %vm705, %v1366, 0
        %1393 = vmatprep.subr.bf16.mxu0 0
        %1394 = vmatpush1.bf16.msra.mxu0 %v1386
        %1395 = vmatprep.subr.bf16.mxu0 0
        %1396 = vmatpush1.bf16.msra.mxu0 %v1387
        %1397 = vmatprep.subr.bf16.mxu0 0
        %1398 = vmatpush1.bf16.msra.mxu0 0
        %1399 = vmatprep.subr.bf16.mxu0 0
        %1400 = vmatpush1.bf16.msra.mxu0 0
        %1401 = vmatprep.subr.bf16.mxu0 0
        %1402 = vmatpush1.bf16.msra.mxu0 0
        %1403 = vmatprep.subr.bf16.mxu0 0
        %1404 = vmatpush1.bf16.msra.mxu0 0
        %1405 = vmatprep.subr.bf16.mxu0 0
        %1406 = vmatpush1.bf16.msra.mxu0 0
        %1407 = vmatprep.subr.bf16.mxu0 0
        %1408 = vmatpush1.bf16.msra.mxu0 0
        %1409 = vmatprep.subr.bf16.mxu0 0
        %1410 = vmatpush1.bf16.msra.mxu0 0
        %1411 = vmatprep.subr.bf16.mxu0 0
        %1412 = vmatpush1.bf16.msra.mxu0 0
        %1413 = vmatprep.subr.bf16.mxu0 0
        %1414 = vmatpush1.bf16.msra.mxu0 0
        %1415 = vmatprep.subr.bf16.mxu0 0
        %1416 = vmatpush1.bf16.msra.mxu0 0
        %1417 = vmatprep.subr.bf16.mxu0 0
        %1418 = vmatpush1.bf16.msra.mxu0 0
        %1419 = vmatprep.subr.bf16.mxu0 0
        %1420 = vmatpush1.bf16.msra.mxu0 0
        %1421 = vmatprep.subr.bf16.mxu0 0
        %1422 = vmatpush1.bf16.msra.mxu0 0
        %1423 = vmatprep.subr.bf16.mxu0 0
        %1424 = vmatpush1.bf16.msra.mxu0 0
        %1425 = vmatprep.mubr.bf16.mxu0 0
        %1426 = vmatmul.mubr.bf16.gmra.mrb[0].mxu0 %v1391
        %v1427 = vpop.f32.mrb[0].mxu0
        %v1428 = vadd.f32 %v1376, %v1427
        %v1429 = vpop.f32.mrb[0].mxu0
        %v1430 = vpop.f32.mrb[0].mxu0
        %v1431 = vpop.f32.mrb[0].mxu0
        %1432 = vdwg.mxu0
        %v1433 = vmul.f32 %v1428, 1.702
        %v1434 = vxor.u32 %v1433, 2147483648
        %v1435 = vmul.f32 %v1434, 1.442695
        %v1436 = vpow.pop %v1435
        %v1437 = vadd.f32 %v1436, 1.0
        %v1438 = vrcp.pop %v1437
        %v1439 = vmul.f32 1.0, %v1438
        %v1440 = vmul.f32 %v1428, %v1439
        %v1441 = vpack.c.bf16 %v1440, %v1440
        %v1442 = vld [vmem:[%s690] sm:$0xf]
        %v1443 = vld [vmem:[%s690 + $0x4] sm:$0xf]
        %v1444 = vld [vmem:[%s690 + $0x8] sm:$0xf]
        %v1445 = vld [vmem:[%s690 + $0xc] sm:$0xf]
        %v1446 = vld [vmem:[%s690 + $0x10] sm:$0xf]
        %v1447 = vld [vmem:[%s690 + $0x14] sm:$0xf]
        %v1448 = vld [vmem:[%s690 + $0x18] sm:$0xf]
        %v1449 = vld [vmem:[%s690 + $0x1c] sm:$0xf]
        %v1450 = vld [vmem:[%s690 + $0x20] sm:$0xf]
        %v1451 = vld [vmem:[%s690 + $0x24] sm:$0xf]
        %v1452 = vld [vmem:[%s690 + $0x28] sm:$0xf]
        %v1453 = vld [vmem:[%s690 + $0x2c] sm:$0xf]
        %v1454 = vld [vmem:[%s690 + $0x30] sm:$0xf]
        %v1455 = vld [vmem:[%s690 + $0x34] sm:$0xf]
        %v1456 = vld [vmem:[%s690 + $0x38] sm:$0xf]
        %v1457 = vld [vmem:[%s690 + $0x3c] sm:$0xf]
        %v1458 = vld [vmem:[%s693] sm:$0x1]
        %v1460 = vlaneseq
        %v1461 = vshrl.u32 %v1460, 7
        %v1462 = vsub.s32 0, %v1461
        %v1463 = vrot.slane %v1458, %v1462
        %v1481 = vunpack.c.l.b16 %v1442
        %v1482 = vunpack.c.l.b16 %v1443
        %v1483 = vunpack.c.l.b16 %v1444
        %v1484 = vunpack.c.l.b16 %v1445
        %v1485 = vunpack.c.l.b16 %v1446
        %v1486 = vunpack.c.l.b16 %v1447
        %v1487 = vunpack.c.l.b16 %v1448
        %v1488 = vunpack.c.l.b16 %v1449
        %v1489 = vunpack.c.l.b16 %v1450
        %v1490 = vunpack.c.l.b16 %v1451
        %v1491 = vunpack.c.l.b16 %v1452
        %v1492 = vunpack.c.l.b16 %v1453
        %v1493 = vunpack.c.l.b16 %v1454
        %v1494 = vunpack.c.l.b16 %v1455
        %v1495 = vunpack.c.l.b16 %v1456
        %v1496 = vunpack.c.l.b16 %v1457
        %v1497 = vpack.c.b16 %v1482, %v1481
        %v1498 = vpack.c.b16 %v1484, %v1483
        %v1499 = vpack.c.b16 %v1486, %v1485
        %v1500 = vpack.c.b16 %v1488, %v1487
        %v1501 = vpack.c.b16 %v1490, %v1489
        %v1502 = vpack.c.b16 %v1492, %v1491
        %v1503 = vpack.c.b16 %v1494, %v1493
        %v1504 = vpack.c.b16 %v1496, %v1495
        %1513 = vmatprep.subr.bf16.mxu0 0
        %1514 = vmatpush1.bf16.msra.mxu0 %v1497
        %1515 = vmatprep.subr.bf16.mxu0 0
        %1516 = vmatpush1.bf16.msra.mxu0 %v1498
        %1517 = vmatprep.subr.bf16.mxu0 0
        %1518 = vmatpush1.bf16.msra.mxu0 %v1499
        %1519 = vmatprep.subr.bf16.mxu0 0
        %1520 = vmatpush1.bf16.msra.mxu0 %v1500
        %1521 = vmatprep.subr.bf16.mxu0 0
        %1522 = vmatpush1.bf16.msra.mxu0 %v1501
        %1523 = vmatprep.subr.bf16.mxu0 0
        %1524 = vmatpush1.bf16.msra.mxu0 %v1502
        %1525 = vmatprep.subr.bf16.mxu0 0
        %1526 = vmatpush1.bf16.msra.mxu0 %v1503
        %1527 = vmatprep.subr.bf16.mxu0 0
        %1528 = vmatpush1.bf16.msra.mxu0 %v1504
        %1529 = vmatprep.subr.bf16.mxu0 0
        %1530 = vmatpush1.bf16.msra.mxu0 0
        %1531 = vmatprep.subr.bf16.mxu0 0
        %1532 = vmatpush1.bf16.msra.mxu0 0
        %1533 = vmatprep.subr.bf16.mxu0 0
        %1534 = vmatpush1.bf16.msra.mxu0 0
        %1535 = vmatprep.subr.bf16.mxu0 0
        %1536 = vmatpush1.bf16.msra.mxu0 0
        %1537 = vmatprep.subr.bf16.mxu0 0
        %1538 = vmatpush1.bf16.msra.mxu0 0
        %1539 = vmatprep.subr.bf16.mxu0 0
        %1540 = vmatpush1.bf16.msra.mxu0 0
        %1541 = vmatprep.subr.bf16.mxu0 0
        %1542 = vmatpush1.bf16.msra.mxu0 0
        %1543 = vmatprep.subr.bf16.mxu0 0
        %1544 = vmatpush1.bf16.msra.mxu0 0
        %1545 = vmatprep.mubr.bf16.mxu0 0
        %1546 = vmatmul.mubr.bf16.gmra.mrb[0].mxu0 %v1441
        %v1547 = vpop.f32.mrb[0].mxu0
        %v1548 = vadd.f32 %v1463, %v1547
        %v1549 = vpop.f32.mrb[0].mxu0
        %v1550 = vpop.f32.mrb[0].mxu0
        %v1551 = vpop.f32.mrb[0].mxu0
        %1552 = vdwg.mxu0
        %v1553 = vadd.f32 %v1336, %v1548
        %1554 = vst.msk [vmem:[#allocation2] sm:$0xff] %vm705, %v1553
        %p1555 = scmp.eq.s32.totalorder %s34, 1
        // Predicated region
        $region85: #{frozen_clip_embed.1} parent=79 // pred_check
          %p1556 = pneg %p1555
        $region86: #{frozen_clip_embed.1} parent=79 // pred_check_branch
          %1558 = sbr.rel (%p1556) target = $region88
        $region87: #{frozen_clip_embed.1} parent=79 // pred_region
          %v1559 = vld [vmem:[%s13] sm:$0x1]
          %v1560 = vld [vmem:[%s14] sm:$0x1]
          %v1561 = vsel %vm705, %v1553, 0.0
          %1562 = vadd.xlane.f32.xlu0 %v1561
          %v1563 = vpop.xlane.xlu0 %1562
          %v1564 = vmul.f32 %v1563, %v709
          %v1565 = vsub.f32 %v1553, %v1564
          %v1566 = vmul.f32 %v1565, %v1565
          %v1567 = vsel %vm705, %v1566, 0.0
          %1568 = vadd.xlane.f32.xlu0 %v1567
          %v1569 = vpop.xlane.xlu0 %1568
          %v1570 = vmul.f32 %v1569, %v709
          %v1571 = vadd.f32 %v1570, 1e-05
          %v1572 = vrsqrt.pop %v1571
          %v1573 = vmul.f32 %v1565, %v1572
          %v1575 = vlaneseq
          %v1576 = vshrl.u32 %v1575, 7
          %v1577 = vsub.s32 0, %v1576
          %v1578 = vrot.slane %v1559, %v1577
          %v1580 = vmul.f32 %v1573, %v1578
          %v1582 = vlaneseq
          %v1583 = vshrl.u32 %v1582, 7
          %v1584 = vsub.s32 0, %v1583
          %v1585 = vrot.slane %v1560, %v1584
          %v1587 = vadd.f32 %v1580, %v1585
          %1588 = vst.msk [vmem:[%s645] sm:$0xff] %vm705, %v1587
        $region88: #{frozen_clip_embed.1} parent=79 // pred_fallthru
          _
        %s1589 = sand.u32 %s429, 1
        %s1590 = scalar_lea.sflag [#allocation4], %s1589
        %s1591 = sand.u32 %s429, 1
        %s1592 = smul.addr %s1591, 8
        %s1593 = scalar_lea.vmem [#allocation3], %s1592
        // Predicated region
        $region89: #{frozen_clip_embed.1} parent=79 // pred_check
          %p1594 = pneg %p439
        $region90: #{frozen_clip_embed.1} parent=79 // pred_check_branch
          %1596 = sbr.rel (%p1594) target = $region92
        $region91: #{frozen_clip_embed.1} parent=79 // pred_region
          %s1598 = ssub.s32 128, 128
          %1599 = vsyncadd %s1590, %s1598
          %s1600 = smul.addr %s33, 128
          %s1601 = scalar_lea.hbm %s15, %s1600
          %s1603 = sshll.u32 %s1593, 4
          %s1604 = int_to_ptr.vmem [resolvable:$true] %s1603
          %1606 = dma.vmem_to_hbm [thread:$0]  %s1604, 128, %s1601, %s1590
        $region92: #{frozen_clip_embed.1} parent=79 // pred_fallthru
          _
      $region80: #{frozen_clip_embed.1} parent=5 // pred_fallthru
        _
      %p1607 = scmp.le.s32.totalorder 2, %s24
      // Predicated region
      $region93: #{frozen_clip_embed.1} parent=5 // pred_check
        %p1608 = pneg %p1607
      $region94: #{frozen_clip_embed.1} parent=5 // pred_check_branch
        %1610 = sbr.rel (%p1608) target = $region96
      $region95: #{frozen_clip_embed.1} parent=5 // pred_region
        %s1611 = ssub.s32 %s24, 2
        // Predicated region
        $region97: #{frozen_clip_embed.1} parent=95 // pred_check
          %p1612 = pneg %p445
        $region98: #{frozen_clip_embed.1} parent=95 // pred_check_branch
          %1614 = sbr.rel (%p1612) target = $region100
        $region99: #{frozen_clip_embed.1} parent=95 // pred_region
          %s1615 = sand.u32 %s430, 1
          %s1616 = scalar_lea.sflag [#allocation4], %s1615
          %s1617 = sand.u32 %s430, 1
          %s1618 = smul.addr %s1617, 8
          %s1619 = scalar_lea.vmem [#allocation3], %s1618
          %1620 = dma.done %s1616, 128
        $region100: #{frozen_clip_embed.1} parent=95 // pred_fallthru
          _
      $region96: #{frozen_clip_embed.1} parent=5 // pred_fallthru
        _
    $region6: #{frozen_clip_embed.1} parent=1 // loop_footer
      %s28 = sadd.s32 1, %s24
    $region7: #{frozen_clip_embed.1} parent=1 // loop_footer_branch
      %23 = sbr.rel target = $region3
    $region8: #{frozen_clip_embed.1} parent=1 // loop_exit
      _
    %1621 = vsyncpa [#allocation4], 1
    %s1622 = scalar_lea.sflag [#allocation4], 1
    %1623 = vsyncpa %s1622, 1

</llo_original>
